<compile_context>
chip_gen: v6e
topology: v6e:2x2x1
jax: 0.10.0
libtpu: 0.0.40
codegen_flags: <defaults>
</compile_context>

<pallas_src>
import functools

import jax
import jax.numpy as jnp
from jax import lax
from jax.experimental import pallas as pl
from jax.experimental.pallas import tpu as pltpu


def _cbr_kernel(p_ref, w_ref, g_ref, bt_ref, o_ref,
                *, N, OH, OW, PH, PW, eps, max_pool):
    """Fused im2col-Conv2d + BatchNorm2d(train) + ReLU + MaxPool2d(3,2).

    p_ref  : [N*OH*OW, KKCin_pad]   im2col patches (lane-padded)
    w_ref  : [KKCin_pad, Cout_pad]  reshaped conv weights (zero-padded)
    g_ref  : [1, Cout_pad]          BN gamma (zero-padded)
    bt_ref : [1, Cout_pad]          BN beta  (zero-padded)
    o_ref  : [N, PH, PW, Cout_pad]  (or [N, OH, OW, Cout_pad] if max_pool=False)
    """
    rows = p_ref.shape[0]
    Cpad = w_ref.shape[1]

    # ---- Conv2d as a single MXU matmul over the padded im2col matrix ----
    # (f32 operands; bf16 operands would be a v6e/v7x-only speedup but would
    #  exceed the 1e-4 tolerance of this test, so we keep f32 everywhere.)
    acc = jnp.dot(p_ref[...], w_ref[...], preferred_element_type=jnp.float32)

    # ---- BatchNorm2d (train mode): MXU ones-row reductions, fused scale/shift
    ones_row = jnp.ones((1, rows), dtype=jnp.float32)
    inv_rows = 1.0 / float(rows)
    s1 = jnp.dot(ones_row, acc, preferred_element_type=jnp.float32)        # sum
    s2 = jnp.dot(ones_row, acc * acc, preferred_element_type=jnp.float32)  # sumsq
    mean = s1 * inv_rows                          # [1, Cpad]
    var = s2 * inv_rows - mean * mean             # biased variance
    scale = g_ref[...] * lax.rsqrt(var + eps)     # EUP rsqrt on one row
    shift = bt_ref[...] - mean * scale
    # Padded channels: acc==0, gamma==beta==0 -> scale==shift==0 -> y==0.

    # ---- normalize + ReLU (lane-dense VPU work) ----
    y = jnp.maximum(acc * scale + shift, 0.0)
    y4 = y.reshape(N, OH, OW, Cpad)

    if not max_pool:
        o_ref[...] = y4.astype(o_ref.dtype)
        return

    # ---- MaxPool2d(kernel=3, stride=2): even/odd reshape splits ----
    # H axis: window i covers rows {2i, 2i+1, 2i+2}
    a = y4[:, 0:2 * PH, :, :].reshape(N, PH, 2, OW, Cpad)
    b = y4[:, 1:1 + 2 * PH, :, :].reshape(N, PH, 2, OW, Cpad)
    rmax = jnp.maximum(jnp.maximum(a[:, :, 0], a[:, :, 1]), b[:, :, 1])
    # W axis: window j covers cols {2j, 2j+1, 2j+2}
    c = rmax[:, :, 0:2 * PW, :].reshape(N, PH, PW, 2, Cpad)
    d = rmax[:, :, 1:1 + 2 * PW, :].reshape(N, PH, PW, 2, Cpad)
    pooled = jnp.maximum(jnp.maximum(c[:, :, :, 0], c[:, :, :, 1]),
                         d[:, :, :, 1])
    # single full-tile, lane-dense store
    o_ref[...] = pooled.astype(o_ref.dtype)


def cbr_block(x_nchw, w_oihw, bias, gamma, beta, *, max_pool=True, eps=1e-5):
    """JAX wrapper matching CBR_Block.forward (NCHW in, NCHW out)."""
    del bias  # cancels exactly under train-mode BN (batch-mean subtraction)

    N, Cin, H, W = x_nchw.shape
    Cout, Cin_w, K, K2 = w_oihw.shape
    assert Cin == Cin_w and K == K2
    OH, OW = H - K + 1, W - K + 1
    if max_pool:
        PH, PW = (OH - 3) // 2 + 1, (OW - 3) // 2 + 1
    else:
        PH, PW = OH, OW

    LANES = 128
    KKC = K * K * Cin
    Kpad = -(-KKC // LANES) * LANES        # contraction dim padded to 128
    Cpad = -(-Cout // LANES) * LANES       # output channels padded to 128
    rows = N * OH * OW

    # ---- layout plumbing (plain JAX): im2col + lane padding ----
    x = jnp.transpose(x_nchw, (0, 2, 3, 1)).astype(jnp.float32)       # NHWC
    taps = [x[:, kh:kh + OH, kw:kw + OW, :]
            for kh in range(K) for kw in range(K)]
    patches = jnp.concatenate(taps, axis=-1).reshape(rows, KKC)
    patches = jnp.pad(patches, ((0, 0), (0, Kpad - KKC)))

    w2d = jnp.transpose(w_oihw, (2, 3, 1, 0)).reshape(KKC, Cout)
    w2d = jnp.pad(w2d.astype(jnp.float32),
                  ((0, Kpad - KKC), (0, Cpad - Cout)))
    g2 = jnp.pad(gamma.reshape(1, Cout).astype(jnp.float32),
                 ((0, 0), (0, Cpad - Cout)))
    bt2 = jnp.pad(beta.reshape(1, Cout).astype(jnp.float32),
                  ((0, 0), (0, Cpad - Cout)))

    out_shape = (N, PH, PW, Cpad) if max_pool else (N, OH, OW, Cpad)

    def full_spec(shape):
        nd = len(shape)
        return pl.BlockSpec(shape, lambda i, nd=nd: (0,) * nd)

    kern = functools.partial(_cbr_kernel, N=N, OH=OH, OW=OW, PH=PH, PW=PW,
                             eps=eps, max_pool=max_pool)

    # TODO(synk): for large N/H/W, tile over output rows with a "parallel"
    # grid axis (two-pass BN or cross-core stats in VMEM_SHARED) so both v7x
    # TensorCores are used and BlockSpec pipelining kicks in; unnecessary at
    # these toy shapes where everything fits VMEM in one block.
    out_nhwc = pl.pallas_call(
        kern,
        grid=(1,),
        in_specs=[full_spec(patches.shape), full_spec(w2d.shape),
                  full_spec(g2.shape), full_spec(bt2.shape)],
        out_specs=full_spec(out_shape),
        out_shape=jax.ShapeDtypeStruct(out_shape, jnp.float32),
        compiler_params=pltpu.CompilerParams(
            dimension_semantics=("arbitrary",)),
    )(patches, w2d, g2, bt2)

    return jnp.transpose(out_nhwc[..., :Cout], (0, 3, 1, 2))          # NCHW


def reference(x, w, b, gamma, beta, eps=1e-5, max_pool=True):
    """Pure-JAX reference of the PyTorch forward pass (NCHW)."""
    y = lax.conv_general_dilated(
        x, w, window_strides=(1, 1), padding='VALID',
        dimension_numbers=('NCHW', 'OIHW', 'NCHW'))
    y = y + b.reshape(1, -1, 1, 1)
    mean = jnp.mean(y, axis=(0, 2, 3), keepdims=True)
    var = jnp.mean((y - mean) ** 2, axis=(0, 2, 3), keepdims=True)
    y = (y - mean) * lax.rsqrt(var + eps)
    y = y * gamma.reshape(1, -1, 1, 1) + beta.reshape(1, -1, 1, 1)
    y = jnp.maximum(y, 0.0)
    if max_pool:
        y = lax.reduce_window(y, -jnp.inf, lax.max,
                              window_dimensions=(1, 1, 3, 3),
                              window_strides=(1, 1, 2, 2),
                              padding='VALID')
    return y


if __name__ == "__main__":
    key = jax.random.PRNGKey(0)
    k1, k2, k3, k4, k5 = jax.random.split(key, 5)

    # Small shapes consistent with CBR_Block(in_channels=4, out_channels=8, kernel_size=3)
    N, Cin, H, W = 2, 4, 16, 16
    Cout, K = 8, 3

    x = jax.random.normal(k1, (N, Cin, H, W), dtype=jnp.float32)
    w = 0.1 * jax.random.normal(k2, (Cout, Cin, K, K), dtype=jnp.float32)
    b = 0.1 * jax.random.normal(k3, (Cout,), dtype=jnp.float32)
    gamma = 1.0 + 0.1 * jax.random.normal(k4, (Cout,), dtype=jnp.float32)
    beta = 0.1 * jax.random.normal(k5, (Cout,), dtype=jnp.float32)

    out = cbr_block(x, w, b, gamma, beta, max_pool=True)
    out = jax.block_until_ready(out)

    ref = reference(x, w, b, gamma, beta, max_pool=True)
    assert out.shape == ref.shape, (out.shape, ref.shape)
    assert jnp.allclose(out, ref, atol=1e-4, rtol=1e-4), \
        float(jnp.max(jnp.abs(out - ref)))

    print("KERNEL_OK")
</pallas_src>

<mosaic_0001>
module attributes {stable_mosaic.version = 11 : i64} {
  func.func @_cbr_kernel(%arg0: i32, %arg1: memref<392x128xf32, #tpu.memory_space<vmem>>, %arg2: memref<128x128xf32, #tpu.memory_space<vmem>>, %arg3: memref<1x128xf32, #tpu.memory_space<vmem>>, %arg4: memref<1x128xf32, #tpu.memory_space<vmem>>, %arg5: memref<2x6x6x128xf32, #tpu.memory_space<vmem>>) attributes {dimension_semantics = [#tpu.dimension_semantics<arbitrary>], iteration_bounds = array<i64: 1>, scalar_prefetch = 0 : i64, scratch_operands = 0 : i64, tpu.core_type = #tpu.core_type<tc>, window_params = [{pipeline_mode = #tpu.pipeline_mode<synchronous>, transform_indices = @transform_0, window_bounds = array<i64: 392, 128>}, {pipeline_mode = #tpu.pipeline_mode<synchronous>, transform_indices = @transform_1, window_bounds = array<i64: 128, 128>}, {pipeline_mode = #tpu.pipeline_mode<synchronous>, transform_indices = @transform_2, window_bounds = array<i64: 1, 128>}, {pipeline_mode = #tpu.pipeline_mode<synchronous>, transform_indices = @transform_3, window_bounds = array<i64: 1, 128>}, {pipeline_mode = #tpu.pipeline_mode<synchronous>, transform_indices = @transform_4, window_bounds = array<i64: 2, 6, 6, 128>}]} {
    %c0 = arith.constant 0 : index
    %c0_0 = arith.constant 0 : index
    %0 = vector.load %arg1[%c0, %c0_0] : memref<392x128xf32, #tpu.memory_space<vmem>>, vector<392x128xf32>
    %c0_1 = arith.constant 0 : index
    %c0_2 = arith.constant 0 : index
    %1 = vector.load %arg2[%c0_1, %c0_2] : memref<128x128xf32, #tpu.memory_space<vmem>>, vector<128x128xf32>
    %cst = arith.constant dense<0.000000e+00> : vector<392x128xf32>
    %2 = tpu.matmul %0, %1, %cst {dimension_numbers = #tpu.dot_dimension_numbers<[1], [0], [0], [1], [0, 0, 1, 1], [], []>} : vector<392x128xf32>, vector<128x128xf32>, vector<392x128xf32> -> vector<392x128xf32>
    %cst_3 = arith.constant 1.000000e+00 : f32
    %3 = vector.broadcast %cst_3 : f32 to vector<1x392xf32>
    %cst_4 = arith.constant dense<0.000000e+00> : vector<1x128xf32>
    %4 = tpu.matmul %3, %2, %cst_4 {dimension_numbers = #tpu.dot_dimension_numbers<[1], [0], [0], [1], [0, 0, 1, 1], [], []>} : vector<1x392xf32>, vector<392x128xf32>, vector<1x128xf32> -> vector<1x128xf32>
    %5 = arith.mulf %2, %2 : vector<392x128xf32>
    %cst_5 = arith.constant dense<0.000000e+00> : vector<1x128xf32>
    %6 = tpu.matmul %3, %5, %cst_5 {dimension_numbers = #tpu.dot_dimension_numbers<[1], [0], [0], [1], [0, 0, 1, 1], [], []>} : vector<1x392xf32>, vector<392x128xf32>, vector<1x128xf32> -> vector<1x128xf32>
    %cst_6 = arith.constant 0.00255102036 : f32
    %7 = vector.broadcast %cst_6 : f32 to vector<1x128xf32>
    %8 = arith.mulf %4, %7 : vector<1x128xf32>
    %cst_7 = arith.constant 0.00255102036 : f32
    %9 = vector.broadcast %cst_7 : f32 to vector<1x128xf32>
    %10 = arith.mulf %6, %9 : vector<1x128xf32>
    %11 = arith.mulf %8, %8 : vector<1x128xf32>
    %12 = arith.subf %10, %11 : vector<1x128xf32>
    %c0_8 = arith.constant 0 : index
    %c0_9 = arith.constant 0 : index
    %13 = vector.load %arg3[%c0_8, %c0_9] : memref<1x128xf32, #tpu.memory_space<vmem>>, vector<1x128xf32>
    %cst_10 = arith.constant 9.99999974E-6 : f32
    %14 = vector.broadcast %cst_10 : f32 to vector<1x128xf32>
    %15 = arith.addf %12, %14 : vector<1x128xf32>
    %16 = math.rsqrt %15 : vector<1x128xf32>
    %17 = arith.mulf %13, %16 : vector<1x128xf32>
    %c0_11 = arith.constant 0 : index
    %c0_12 = arith.constant 0 : index
    %18 = vector.load %arg4[%c0_11, %c0_12] : memref<1x128xf32, #tpu.memory_space<vmem>>, vector<1x128xf32>
    %19 = arith.mulf %8, %17 : vector<1x128xf32>
    %20 = arith.subf %18, %19 : vector<1x128xf32>
    %21 = vector.broadcast %17 : vector<1x128xf32> to vector<392x128xf32>
    %22 = arith.mulf %2, %21 : vector<392x128xf32>
    %23 = vector.broadcast %20 : vector<1x128xf32> to vector<392x128xf32>
    %24 = arith.addf %22, %23 : vector<392x128xf32>
    %cst_13 = arith.constant 0.000000e+00 : f32
    %25 = vector.broadcast %cst_13 : f32 to vector<392x128xf32>
    %26 = arith.maximumf %24, %25 : vector<392x128xf32>
    %27 = vector.shape_cast %26 : vector<392x128xf32> to vector<2x14x14x128xf32>
    %28 = vector.extract_strided_slice %27 {offsets = [0, 0, 0, 0], sizes = [2, 12, 14, 128], strides = [1, 1, 1, 1]} : vector<2x14x14x128xf32> to vector<2x12x14x128xf32>
    %29 = vector.shape_cast %28 : vector<2x12x14x128xf32> to vector<2x6x2x14x128xf32>
    %30 = vector.extract_strided_slice %27 {offsets = [0, 1, 0, 0], sizes = [2, 12, 14, 128], strides = [1, 1, 1, 1]} : vector<2x14x14x128xf32> to vector<2x12x14x128xf32>
    %31 = vector.shape_cast %30 : vector<2x12x14x128xf32> to vector<2x6x2x14x128xf32>
    %32 = vector.extract_strided_slice %29 {offsets = [0, 0, 0, 0, 0], sizes = [2, 6, 1, 14, 128], strides = [1, 1, 1, 1, 1]} : vector<2x6x2x14x128xf32> to vector<2x6x1x14x128xf32>
    %33 = vector.shape_cast %32 : vector<2x6x1x14x128xf32> to vector<2x6x14x128xf32>
    %34 = vector.extract_strided_slice %29 {offsets = [0, 0, 1, 0, 0], sizes = [2, 6, 1, 14, 128], strides = [1, 1, 1, 1, 1]} : vector<2x6x2x14x128xf32> to vector<2x6x1x14x128xf32>
    %35 = vector.shape_cast %34 : vector<2x6x1x14x128xf32> to vector<2x6x14x128xf32>
    %36 = arith.maximumf %33, %35 : vector<2x6x14x128xf32>
    %37 = vector.extract_strided_slice %31 {offsets = [0, 0, 1, 0, 0], sizes = [2, 6, 1, 14, 128], strides = [1, 1, 1, 1, 1]} : vector<2x6x2x14x128xf32> to vector<2x6x1x14x128xf32>
    %38 = vector.shape_cast %37 : vector<2x6x1x14x128xf32> to vector<2x6x14x128xf32>
    %39 = arith.maximumf %36, %38 : vector<2x6x14x128xf32>
    %40 = vector.extract_strided_slice %39 {offsets = [0, 0, 0, 0], sizes = [2, 6, 12, 128], strides = [1, 1, 1, 1]} : vector<2x6x14x128xf32> to vector<2x6x12x128xf32>
    %41 = vector.shape_cast %40 : vector<2x6x12x128xf32> to vector<2x6x6x2x128xf32>
    %42 = vector.extract_strided_slice %39 {offsets = [0, 0, 1, 0], sizes = [2, 6, 12, 128], strides = [1, 1, 1, 1]} : vector<2x6x14x128xf32> to vector<2x6x12x128xf32>
    %43 = vector.shape_cast %42 : vector<2x6x12x128xf32> to vector<2x6x6x2x128xf32>
    %44 = vector.extract_strided_slice %41 {offsets = [0, 0, 0, 0, 0], sizes = [2, 6, 6, 1, 128], strides = [1, 1, 1, 1, 1]} : vector<2x6x6x2x128xf32> to vector<2x6x6x1x128xf32>
    %45 = vector.shape_cast %44 : vector<2x6x6x1x128xf32> to vector<2x6x6x128xf32>
    %46 = vector.extract_strided_slice %41 {offsets = [0, 0, 0, 1, 0], sizes = [2, 6, 6, 1, 128], strides = [1, 1, 1, 1, 1]} : vector<2x6x6x2x128xf32> to vector<2x6x6x1x128xf32>
    %47 = vector.shape_cast %46 : vector<2x6x6x1x128xf32> to vector<2x6x6x128xf32>
    %48 = arith.maximumf %45, %47 : vector<2x6x6x128xf32>
    %49 = vector.extract_strided_slice %43 {offsets = [0, 0, 0, 1, 0], sizes = [2, 6, 6, 1, 128], strides = [1, 1, 1, 1, 1]} : vector<2x6x6x2x128xf32> to vector<2x6x6x1x128xf32>
    %50 = vector.shape_cast %49 : vector<2x6x6x1x128xf32> to vector<2x6x6x128xf32>
    %51 = arith.maximumf %48, %50 : vector<2x6x6x128xf32>
    %c0_14 = arith.constant 0 : index
    %c0_15 = arith.constant 0 : index
    %c0_16 = arith.constant 0 : index
    %c0_17 = arith.constant 0 : index
    %52 = vector.load %arg5[%c0_14, %c0_15, %c0_16, %c0_17] : memref<2x6x6x128xf32, #tpu.memory_space<vmem>>, vector<2x6x6x128xf32>
    tpu.vector_store %arg5[%c0_14, %c0_15, %c0_16, %c0_17], %51 {strides = array<i32>} : memref<2x6x6x128xf32, #tpu.memory_space<vmem>>, vector<2x6x6x128xf32>,
    return
  }
  func.func @transform_0(%arg0: i32) -> (i32, i32) {
    %c0_i32 = arith.constant 0 : i32
    %c0_i32_0 = arith.constant 0 : i32
    %c0_i32_1 = arith.constant 0 : i32
    return %c0_i32, %c0_i32_0 : i32, i32
  }
  func.func @transform_1(%arg0: i32) -> (i32, i32) {
    %c0_i32 = arith.constant 0 : i32
    %c0_i32_0 = arith.constant 0 : i32
    %c0_i32_1 = arith.constant 0 : i32
    return %c0_i32, %c0_i32_0 : i32, i32
  }
  func.func @transform_2(%arg0: i32) -> (i32, i32) {
    %c0_i32 = arith.constant 0 : i32
    %c0_i32_0 = arith.constant 0 : i32
    %c0_i32_1 = arith.constant 0 : i32
    return %c0_i32, %c0_i32_0 : i32, i32
  }
  func.func @transform_3(%arg0: i32) -> (i32, i32) {
    %c0_i32 = arith.constant 0 : i32
    %c0_i32_0 = arith.constant 0 : i32
    %c0_i32_1 = arith.constant 0 : i32
    return %c0_i32, %c0_i32_0 : i32, i32
  }
  func.func @transform_4(%arg0: i32) -> (i32, i32, i32, i32) {
    %c0_i32 = arith.constant 0 : i32
    %c0_i32_0 = arith.constant 0 : i32
    %c0_i32_1 = arith.constant 0 : i32
    %c0_i32_2 = arith.constant 0 : i32
    %c0_i32_3 = arith.constant 0 : i32
    return %c0_i32, %c0_i32_0, %c0_i32_1, %c0_i32_2 : i32, i32, i32, i32
  }
}

</mosaic_0001>

<llo_original>
// kernel: tpu_custom_call.1
$region0: #{tpu_custom_call.1}
  #allocation0 [shape = 'u32[]', space=smem, size = 0x4, offset = 0x4, fixed_abs, tag = 'smem constant byte address 0x4 - core index']
  #allocation1 [shape = 'u32[144,128]{1,0:T(1,128)}', space=vmem, size = 0x12000, scoped, tag = 'internal scratch']
  %s0 = inlined_call_operand.hbm [shape: f32[392,128], index: 0, kind: input, shape index: {}]
  %s1 = inlined_call_operand.hbm [shape: f32[128,128], index: 1, kind: input, shape index: {}]
  %s2 = inlined_call_operand.vmem [shape: f32[1,128], index: 2, kind: input, shape index: {}]
  %s3 = inlined_call_operand.vmem [shape: f32[1,128], index: 3, kind: input, shape index: {}]
  %s4 = inlined_call_operand.vmem [shape: f32[2,6,6,128], index: 4, kind: output, shape index: {}]
  %s5 = sld [smem:[#allocation0]]
  $region34: #{tpu_custom_call.1} parent=0
    _
  %s7 = ssub.s32 1, %s5
  %s8 = scalar_select 0, %s7, %s5
  $region1: #{tpu_custom_call.1} parent=0
    #allocation2 [shape = 'u8[200704]{0}', space=vmem, size = 0x31000, scoped, tag = 'input window, operand 0, single buffered']
    #allocation3 [shape = 's32[1]{0}', space=sflag, size = 0x4, scoped, tag = 'scoped memory for tpu_custom_call.1']
    #allocation4 [shape = 'u8[65536]{0}', space=vmem, size = 0x10000, scoped, tag = 'input window, operand 1, single buffered']
    #allocation5 [shape = 's32[1]{0}', space=sflag, size = 0x4, scoped, tag = 'scoped memory for tpu_custom_call.1']
    %9 = vsyncpa [#allocation3], 0
    %10 = vsyncpa [#allocation5], 0
    // Predicated region
    $region2: #{tpu_custom_call.1} parent=1 // pred_check
      _
    $region3: #{tpu_custom_call.1} parent=1 // pred_check_branch
      %12 = sbr.rel (0) target = $region5
    $region4: #{tpu_custom_call.1} parent=1 // pred_region
      %s14 = ssub.s32 6272, 6272
      %15 = vsyncadd [#allocation3], %s14
      %s16 = sshll.u32 [#allocation2], 4
      %s17 = int_to_ptr.vmem [resolvable:$true] %s16
      %22 = dma.hbm_to_vmem [thread:$0]  %s0, 6272, %s17, [#allocation3], 128, 128, 8
    $region5: #{tpu_custom_call.1} parent=1 // pred_fallthru
      _
    // Predicated region
    $region6: #{tpu_custom_call.1} parent=1 // pred_check
      _
    $region7: #{tpu_custom_call.1} parent=1 // pred_check_branch
      %24 = sbr.rel (0) target = $region9
    $region8: #{tpu_custom_call.1} parent=1 // pred_region
      %s26 = ssub.s32 2048, 2048
      %27 = vsyncadd [#allocation5], %s26
      %s28 = sshll.u32 [#allocation4], 4
      %s29 = int_to_ptr.vmem [resolvable:$true] %s28
      %34 = dma.hbm_to_vmem [thread:$0]  %s1, 2048, %s29, [#allocation5], 128, 128, 8
    $region9: #{tpu_custom_call.1} parent=1 // pred_fallthru
      _
    // Predicated region
    $region10: #{tpu_custom_call.1} parent=1 // pred_check
      _
    $region11: #{tpu_custom_call.1} parent=1 // pred_check_branch
      %36 = sbr.rel (0) target = $region13
    $region12: #{tpu_custom_call.1} parent=1 // pred_region
      _
    $region13: #{tpu_custom_call.1} parent=1 // pred_fallthru
      _
    // Predicated region
    $region14: #{tpu_custom_call.1} parent=1 // pred_check
      _
    $region15: #{tpu_custom_call.1} parent=1 // pred_check_branch
      %38 = sbr.rel (0) target = $region17
    $region16: #{tpu_custom_call.1} parent=1 // pred_region
      _
    $region17: #{tpu_custom_call.1} parent=1 // pred_fallthru
      _
    // Predicated region
    $region18: #{tpu_custom_call.1} parent=1 // pred_check
      _
    $region19: #{tpu_custom_call.1} parent=1 // pred_check_branch
      %40 = sbr.rel (0) target = $region21
    $region20: #{tpu_custom_call.1} parent=1 // pred_region
      %41 = dma.done [#allocation3], 6272
    $region21: #{tpu_custom_call.1} parent=1 // pred_fallthru
      _
    // Predicated region
    $region22: #{tpu_custom_call.1} parent=1 // pred_check
      _
    $region23: #{tpu_custom_call.1} parent=1 // pred_check_branch
      %43 = sbr.rel (0) target = $region25
    $region24: #{tpu_custom_call.1} parent=1 // pred_region
      %44 = dma.done [#allocation5], 2048
    $region25: #{tpu_custom_call.1} parent=1 // pred_fallthru
      _
    %v45 = vld [vmem:[#allocation2] sm:$0xff]
    %v46 = vld [vmem:[#allocation2 + $0x8] sm:$0xff]
    %v47 = vld [vmem:[#allocation2 + $0x10] sm:$0xff]
    %v48 = vld [vmem:[#allocation2 + $0x18] sm:$0xff]
    %v49 = vld [vmem:[#allocation2 + $0x20] sm:$0xff]
    %v50 = vld [vmem:[#allocation2 + $0x28] sm:$0xff]
    %v51 = vld [vmem:[#allocation2 + $0x30] sm:$0xff]
    %v52 = vld [vmem:[#allocation2 + $0x38] sm:$0xff]
    %v53 = vld [vmem:[#allocation2 + $0x40] sm:$0xff]
    %v54 = vld [vmem:[#allocation2 + $0x48] sm:$0xff]
    %v55 = vld [vmem:[#allocation2 + $0x50] sm:$0xff]
    %v56 = vld [vmem:[#allocation2 + $0x58] sm:$0xff]
    %v57 = vld [vmem:[#allocation2 + $0x60] sm:$0xff]
    %v58 = vld [vmem:[#allocation2 + $0x68] sm:$0xff]
    %v59 = vld [vmem:[#allocation2 + $0x70] sm:$0xff]
    %v60 = vld [vmem:[#allocation2 + $0x78] sm:$0xff]
    %v61 = vld [vmem:[#allocation2 + $0x80] sm:$0xff]
    %v62 = vld [vmem:[#allocation2 + $0x88] sm:$0xff]
    %v63 = vld [vmem:[#allocation2 + $0x90] sm:$0xff]
    %v64 = vld [vmem:[#allocation2 + $0x98] sm:$0xff]
    %v65 = vld [vmem:[#allocation2 + $0xa0] sm:$0xff]
    %v66 = vld [vmem:[#allocation2 + $0xa8] sm:$0xff]
    %v67 = vld [vmem:[#allocation2 + $0xb0] sm:$0xff]
    %v68 = vld [vmem:[#allocation2 + $0xb8] sm:$0xff]
    %v69 = vld [vmem:[#allocation2 + $0xc0] sm:$0xff]
    %v70 = vld [vmem:[#allocation2 + $0xc8] sm:$0xff]
    %v71 = vld [vmem:[#allocation2 + $0xd0] sm:$0xff]
    %v72 = vld [vmem:[#allocation2 + $0xd8] sm:$0xff]
    %v73 = vld [vmem:[#allocation2 + $0xe0] sm:$0xff]
    %v74 = vld [vmem:[#allocation2 + $0xe8] sm:$0xff]
    %v75 = vld [vmem:[#allocation2 + $0xf0] sm:$0xff]
    %v76 = vld [vmem:[#allocation2 + $0xf8] sm:$0xff]
    %v77 = vld [vmem:[#allocation2 + $0x100] sm:$0xff]
    %v78 = vld [vmem:[#allocation2 + $0x108] sm:$0xff]
    %v79 = vld [vmem:[#allocation2 + $0x110] sm:$0xff]
    %v80 = vld [vmem:[#allocation2 + $0x118] sm:$0xff]
    %v81 = vld [vmem:[#allocation2 + $0x120] sm:$0xff]
    %v82 = vld [vmem:[#allocation2 + $0x128] sm:$0xff]
    %v83 = vld [vmem:[#allocation2 + $0x130] sm:$0xff]
    %v84 = vld [vmem:[#allocation2 + $0x138] sm:$0xff]
    %v85 = vld [vmem:[#allocation2 + $0x140] sm:$0xff]
    %v86 = vld [vmem:[#allocation2 + $0x148] sm:$0xff]
    %v87 = vld [vmem:[#allocation2 + $0x150] sm:$0xff]
    %v88 = vld [vmem:[#allocation2 + $0x158] sm:$0xff]
    %v89 = vld [vmem:[#allocation2 + $0x160] sm:$0xff]
    %v90 = vld [vmem:[#allocation2 + $0x168] sm:$0xff]
    %v91 = vld [vmem:[#allocation2 + $0x170] sm:$0xff]
    %v92 = vld [vmem:[#allocation2 + $0x178] sm:$0xff]
    %v93 = vld [vmem:[#allocation2 + $0x180] sm:$0xff]
    %v94 = vld [vmem:[#allocation4] sm:$0xff]
    %v95 = vld [vmem:[#allocation4 + $0x8] sm:$0xff]
    %v96 = vld [vmem:[#allocation4 + $0x10] sm:$0xff]
    %v97 = vld [vmem:[#allocation4 + $0x18] sm:$0xff]
    %v98 = vld [vmem:[#allocation4 + $0x20] sm:$0xff]
    %v99 = vld [vmem:[#allocation4 + $0x28] sm:$0xff]
    %v100 = vld [vmem:[#allocation4 + $0x30] sm:$0xff]
    %v101 = vld [vmem:[#allocation4 + $0x38] sm:$0xff]
    %v102 = vld [vmem:[#allocation4 + $0x40] sm:$0xff]
    %v103 = vld [vmem:[#allocation4 + $0x48] sm:$0xff]
    %v104 = vld [vmem:[#allocation4 + $0x50] sm:$0xff]
    %v105 = vld [vmem:[#allocation4 + $0x58] sm:$0xff]
    %v106 = vld [vmem:[#allocation4 + $0x60] sm:$0xff]
    %v107 = vld [vmem:[#allocation4 + $0x68] sm:$0xff]
    %v108 = vld [vmem:[#allocation4 + $0x70] sm:$0xff]
    %v109 = vld [vmem:[#allocation4 + $0x78] sm:$0xff]
    %110 = vmatprep.subr.mxu0 0.0
    %111 = vmatpush1.msra.mxu0 %v109
    %112 = vmatprep.subr.mxu0 0.0
    %113 = vmatpush1.msra.mxu0 %v108
    %114 = vmatprep.subr.mxu0 0.0
    %115 = vmatpush1.msra.mxu0 %v107
    %116 = vmatprep.subr.mxu0 0.0
    %117 = vmatpush1.msra.mxu0 %v106
    %118 = vmatprep.subr.mxu0 0.0
    %119 = vmatpush1.msra.mxu0 %v105
    %120 = vmatprep.subr.mxu0 0.0
    %121 = vmatpush1.msra.mxu0 %v104
    %122 = vmatprep.subr.mxu0 0.0
    %123 = vmatpush1.msra.mxu0 %v103
    %124 = vmatprep.subr.mxu0 0.0
    %125 = vmatpush1.msra.mxu0 %v102
    %126 = vmatprep.subr.mxu0 0.0
    %127 = vmatpush1.msra.mxu0 %v101
    %128 = vmatprep.subr.mxu0 0.0
    %129 = vmatpush1.msra.mxu0 %v100
    %130 = vmatprep.subr.mxu0 0.0
    %131 = vmatpush1.msra.mxu0 %v99
    %132 = vmatprep.subr.mxu0 0.0
    %133 = vmatpush1.msra.mxu0 %v98
    %134 = vmatprep.subr.mxu0 0.0
    %135 = vmatpush1.msra.mxu0 %v97
    %136 = vmatprep.subr.mxu0 0.0
    %137 = vmatpush1.msra.mxu0 %v96
    %138 = vmatprep.subr.mxu0 0.0
    %139 = vmatpush1.msra.mxu0 %v95
    %140 = vmatprep.subr.mxu0 0.0
    %141 = vmatpush1.msra.mxu0 %v94
    %142 = vmatprep.subr.mxu0 0.0
    %143 = vmatpush2.msra.mxu0 0.0
    %144 = vmatprep.subr.mxu0 0.0
    %145 = vmatpush2.msra.mxu0 0.0
    %146 = vmatprep.subr.mxu0 0.0
    %147 = vmatpush2.msra.mxu0 0.0
    %148 = vmatprep.subr.mxu0 0.0
    %149 = vmatpush2.msra.mxu0 0.0
    %150 = vmatprep.subr.mxu0 0.0
    %151 = vmatpush2.msra.mxu0 0.0
    %152 = vmatprep.subr.mxu0 0.0
    %153 = vmatpush2.msra.mxu0 0.0
    %154 = vmatprep.subr.mxu0 0.0
    %155 = vmatpush2.msra.mxu0 0.0
    %156 = vmatprep.subr.mxu0 0.0
    %157 = vmatpush2.msra.mxu0 0.0
    %158 = vmatprep.subr.mxu0 0.0
    %159 = vmatpush2.msra.mxu0 0.0
    %160 = vmatprep.subr.mxu0 0.0
    %161 = vmatpush2.msra.mxu0 0.0
    %162 = vmatprep.subr.mxu0 0.0
    %163 = vmatpush2.msra.mxu0 0.0
    %164 = vmatprep.subr.mxu0 0.0
    %165 = vmatpush2.msra.mxu0 0.0
    %166 = vmatprep.subr.mxu0 0.0
    %167 = vmatpush2.msra.mxu0 0.0
    %168 = vmatprep.subr.mxu0 0.0
    %169 = vmatpush2.msra.mxu0 0.0
    %170 = vmatprep.subr.mxu0 0.0
    %171 = vmatpush2.msra.mxu0 0.0
    %172 = vmatprep.subr.mxu0 0.0
    %173 = vmatpush2.msra.mxu0 0.0
    %174 = vmatprep.mubr.f32.mxu0 0.0
    %175 = vmatmul.mubr.f32.gmra.mxu0 %v45
    %v176 = vpop.f32.mrf.mxu0
    %v177 = vadd.f32 0.0, %v176
    %v178 = vpop.f32.mrf.mxu0
    %179 = vmatprep.mubr.f32.mxu0 0.0
    %180 = vmatmul.mubr.f32.gmra.mxu0 %v46
    %v181 = vpop.f32.mrf.mxu0
    %v182 = vadd.f32 0.0, %v181
    %v183 = vpop.f32.mrf.mxu0
    %184 = vmatprep.mubr.f32.mxu0 0.0
    %185 = vmatmul.mubr.f32.gmra.mxu0 %v47
    %v186 = vpop.f32.mrf.mxu0
    %v187 = vadd.f32 0.0, %v186
    %v188 = vpop.f32.mrf.mxu0
    %189 = vmatprep.mubr.f32.mxu0 0.0
    %190 = vmatmul.mubr.f32.gmra.mxu0 %v48
    %v191 = vpop.f32.mrf.mxu0
    %v192 = vadd.f32 0.0, %v191
    %v193 = vpop.f32.mrf.mxu0
    %194 = vmatprep.mubr.f32.mxu0 0.0
    %195 = vmatmul.mubr.f32.gmra.mxu0 %v49
    %v196 = vpop.f32.mrf.mxu0
    %v197 = vadd.f32 0.0, %v196
    %v198 = vpop.f32.mrf.mxu0
    %199 = vmatprep.mubr.f32.mxu0 0.0
    %200 = vmatmul.mubr.f32.gmra.mxu0 %v50
    %v201 = vpop.f32.mrf.mxu0
    %v202 = vadd.f32 0.0, %v201
    %v203 = vpop.f32.mrf.mxu0
    %204 = vmatprep.mubr.f32.mxu0 0.0
    %205 = vmatmul.mubr.f32.gmra.mxu0 %v51
    %v206 = vpop.f32.mrf.mxu0
    %v207 = vadd.f32 0.0, %v206
    %v208 = vpop.f32.mrf.mxu0
    %209 = vmatprep.mubr.f32.mxu0 0.0
    %210 = vmatmul.mubr.f32.gmra.mxu0 %v52
    %v211 = vpop.f32.mrf.mxu0
    %v212 = vadd.f32 0.0, %v211
    %v213 = vpop.f32.mrf.mxu0
    %214 = vmatprep.mubr.f32.mxu0 0.0
    %215 = vmatmul.mubr.f32.gmra.mxu0 %v53
    %v216 = vpop.f32.mrf.mxu0
    %v217 = vadd.f32 0.0, %v216
    %v218 = vpop.f32.mrf.mxu0
    %219 = vmatprep.mubr.f32.mxu0 0.0
    %220 = vmatmul.mubr.f32.gmra.mxu0 %v54
    %v221 = vpop.f32.mrf.mxu0
    %v222 = vadd.f32 0.0, %v221
    %v223 = vpop.f32.mrf.mxu0
    %224 = vmatprep.mubr.f32.mxu0 0.0
    %225 = vmatmul.mubr.f32.gmra.mxu0 %v55
    %v226 = vpop.f32.mrf.mxu0
    %v227 = vadd.f32 0.0, %v226
    %v228 = vpop.f32.mrf.mxu0
    %229 = vmatprep.mubr.f32.mxu0 0.0
    %230 = vmatmul.mubr.f32.gmra.mxu0 %v56
    %v231 = vpop.f32.mrf.mxu0
    %v232 = vadd.f32 0.0, %v231
    %v233 = vpop.f32.mrf.mxu0
    %234 = vmatprep.mubr.f32.mxu0 0.0
    %235 = vmatmul.mubr.f32.gmra.mxu0 %v57
    %v236 = vpop.f32.mrf.mxu0
    %v237 = vadd.f32 0.0, %v236
    %v238 = vpop.f32.mrf.mxu0
    %239 = vmatprep.mubr.f32.mxu0 0.0
    %240 = vmatmul.mubr.f32.gmra.mxu0 %v58
    %v241 = vpop.f32.mrf.mxu0
    %v242 = vadd.f32 0.0, %v241
    %v243 = vpop.f32.mrf.mxu0
    %244 = vmatprep.mubr.f32.mxu0 0.0
    %245 = vmatmul.mubr.f32.gmra.mxu0 %v59
    %v246 = vpop.f32.mrf.mxu0
    %v247 = vadd.f32 0.0, %v246
    %v248 = vpop.f32.mrf.mxu0
    %249 = vmatprep.mubr.f32.mxu0 0.0
    %250 = vmatmul.mubr.f32.gmra.mxu0 %v60
    %v251 = vpop.f32.mrf.mxu0
    %v252 = vadd.f32 0.0, %v251
    %v253 = vpop.f32.mrf.mxu0
    %254 = vmatprep.mubr.f32.mxu0 0.0
    %255 = vmatmul.mubr.f32.gmra.mxu0 %v61
    %v256 = vpop.f32.mrf.mxu0
    %v257 = vadd.f32 0.0, %v256
    %v258 = vpop.f32.mrf.mxu0
    %259 = vmatprep.mubr.f32.mxu0 0.0
    %260 = vmatmul.mubr.f32.gmra.mxu0 %v62
    %v261 = vpop.f32.mrf.mxu0
    %v262 = vadd.f32 0.0, %v261
    %v263 = vpop.f32.mrf.mxu0
    %264 = vmatprep.mubr.f32.mxu0 0.0
    %265 = vmatmul.mubr.f32.gmra.mxu0 %v63
    %v266 = vpop.f32.mrf.mxu0
    %v267 = vadd.f32 0.0, %v266
    %v268 = vpop.f32.mrf.mxu0
    %269 = vmatprep.mubr.f32.mxu0 0.0
    %270 = vmatmul.mubr.f32.gmra.mxu0 %v64
    %v271 = vpop.f32.mrf.mxu0
    %v272 = vadd.f32 0.0, %v271
    %v273 = vpop.f32.mrf.mxu0
    %274 = vmatprep.mubr.f32.mxu0 0.0
    %275 = vmatmul.mubr.f32.gmra.mxu0 %v65
    %v276 = vpop.f32.mrf.mxu0
    %v277 = vadd.f32 0.0, %v276
    %v278 = vpop.f32.mrf.mxu0
    %279 = vmatprep.mubr.f32.mxu0 0.0
    %280 = vmatmul.mubr.f32.gmra.mxu0 %v66
    %v281 = vpop.f32.mrf.mxu0
    %v282 = vadd.f32 0.0, %v281
    %v283 = vpop.f32.mrf.mxu0
    %284 = vmatprep.mubr.f32.mxu0 0.0
    %285 = vmatmul.mubr.f32.gmra.mxu0 %v67
    %v286 = vpop.f32.mrf.mxu0
    %v287 = vadd.f32 0.0, %v286
    %v288 = vpop.f32.mrf.mxu0
    %289 = vmatprep.mubr.f32.mxu0 0.0
    %290 = vmatmul.mubr.f32.gmra.mxu0 %v68
    %v291 = vpop.f32.mrf.mxu0
    %v292 = vadd.f32 0.0, %v291
    %v293 = vpop.f32.mrf.mxu0
    %294 = vmatprep.mubr.f32.mxu0 0.0
    %295 = vmatmul.mubr.f32.gmra.mxu0 %v69
    %v296 = vpop.f32.mrf.mxu0
    %v297 = vadd.f32 0.0, %v296
    %v298 = vpop.f32.mrf.mxu0
    %299 = vmatprep.mubr.f32.mxu0 0.0
    %300 = vmatmul.mubr.f32.gmra.mxu0 %v70
    %v301 = vpop.f32.mrf.mxu0
    %v302 = vadd.f32 0.0, %v301
    %v303 = vpop.f32.mrf.mxu0
    %304 = vmatprep.mubr.f32.mxu0 0.0
    %305 = vmatmul.mubr.f32.gmra.mxu0 %v71
    %v306 = vpop.f32.mrf.mxu0
    %v307 = vadd.f32 0.0, %v306
    %v308 = vpop.f32.mrf.mxu0
    %309 = vmatprep.mubr.f32.mxu0 0.0
    %310 = vmatmul.mubr.f32.gmra.mxu0 %v72
    %v311 = vpop.f32.mrf.mxu0
    %v312 = vadd.f32 0.0, %v311
    %v313 = vpop.f32.mrf.mxu0
    %314 = vmatprep.mubr.f32.mxu0 0.0
    %315 = vmatmul.mubr.f32.gmra.mxu0 %v73
    %v316 = vpop.f32.mrf.mxu0
    %v317 = vadd.f32 0.0, %v316
    %v318 = vpop.f32.mrf.mxu0
    %319 = vmatprep.mubr.f32.mxu0 0.0
    %320 = vmatmul.mubr.f32.gmra.mxu0 %v74
    %v321 = vpop.f32.mrf.mxu0
    %v322 = vadd.f32 0.0, %v321
    %v323 = vpop.f32.mrf.mxu0
    %324 = vmatprep.mubr.f32.mxu0 0.0
    %325 = vmatmul.mubr.f32.gmra.mxu0 %v75
    %v326 = vpop.f32.mrf.mxu0
    %v327 = vadd.f32 0.0, %v326
    %v328 = vpop.f32.mrf.mxu0
    %329 = vmatprep.mubr.f32.mxu0 0.0
    %330 = vmatmul.mubr.f32.gmra.mxu0 %v76
    %v331 = vpop.f32.mrf.mxu0
    %v332 = vadd.f32 0.0, %v331
    %v333 = vpop.f32.mrf.mxu0
    %334 = vmatprep.mubr.f32.mxu0 0.0
    %335 = vmatmul.mubr.f32.gmra.mxu0 %v77
    %v336 = vpop.f32.mrf.mxu0
    %v337 = vadd.f32 0.0, %v336
    %v338 = vpop.f32.mrf.mxu0
    %339 = vmatprep.mubr.f32.mxu0 0.0
    %340 = vmatmul.mubr.f32.gmra.mxu0 %v78
    %v341 = vpop.f32.mrf.mxu0
    %v342 = vadd.f32 0.0, %v341
    %v343 = vpop.f32.mrf.mxu0
    %344 = vmatprep.mubr.f32.mxu0 0.0
    %345 = vmatmul.mubr.f32.gmra.mxu0 %v79
    %v346 = vpop.f32.mrf.mxu0
    %v347 = vadd.f32 0.0, %v346
    %v348 = vpop.f32.mrf.mxu0
    %349 = vmatprep.mubr.f32.mxu0 0.0
    %350 = vmatmul.mubr.f32.gmra.mxu0 %v80
    %v351 = vpop.f32.mrf.mxu0
    %v352 = vadd.f32 0.0, %v351
    %v353 = vpop.f32.mrf.mxu0
    %354 = vmatprep.mubr.f32.mxu0 0.0
    %355 = vmatmul.mubr.f32.gmra.mxu0 %v81
    %v356 = vpop.f32.mrf.mxu0
    %v357 = vadd.f32 0.0, %v356
    %v358 = vpop.f32.mrf.mxu0
    %359 = vmatprep.mubr.f32.mxu0 0.0
    %360 = vmatmul.mubr.f32.gmra.mxu0 %v82
    %v361 = vpop.f32.mrf.mxu0
    %v362 = vadd.f32 0.0, %v361
    %v363 = vpop.f32.mrf.mxu0
    %364 = vmatprep.mubr.f32.mxu0 0.0
    %365 = vmatmul.mubr.f32.gmra.mxu0 %v83
    %v366 = vpop.f32.mrf.mxu0
    %v367 = vadd.f32 0.0, %v366
    %v368 = vpop.f32.mrf.mxu0
    %369 = vmatprep.mubr.f32.mxu0 0.0
    %370 = vmatmul.mubr.f32.gmra.mxu0 %v84
    %v371 = vpop.f32.mrf.mxu0
    %v372 = vadd.f32 0.0, %v371
    %v373 = vpop.f32.mrf.mxu0
    %374 = vmatprep.mubr.f32.mxu0 0.0
    %375 = vmatmul.mubr.f32.gmra.mxu0 %v85
    %v376 = vpop.f32.mrf.mxu0
    %v377 = vadd.f32 0.0, %v376
    %v378 = vpop.f32.mrf.mxu0
    %379 = vmatprep.mubr.f32.mxu0 0.0
    %380 = vmatmul.mubr.f32.gmra.mxu0 %v86
    %v381 = vpop.f32.mrf.mxu0
    %v382 = vadd.f32 0.0, %v381
    %v383 = vpop.f32.mrf.mxu0
    %384 = vmatprep.mubr.f32.mxu0 0.0
    %385 = vmatmul.mubr.f32.gmra.mxu0 %v87
    %v386 = vpop.f32.mrf.mxu0
    %v387 = vadd.f32 0.0, %v386
    %v388 = vpop.f32.mrf.mxu0
    %389 = vmatprep.mubr.f32.mxu0 0.0
    %390 = vmatmul.mubr.f32.gmra.mxu0 %v88
    %v391 = vpop.f32.mrf.mxu0
    %v392 = vadd.f32 0.0, %v391
    %v393 = vpop.f32.mrf.mxu0
    %394 = vmatprep.mubr.f32.mxu0 0.0
    %395 = vmatmul.mubr.f32.gmra.mxu0 %v89
    %v396 = vpop.f32.mrf.mxu0
    %v397 = vadd.f32 0.0, %v396
    %v398 = vpop.f32.mrf.mxu0
    %399 = vmatprep.mubr.f32.mxu0 0.0
    %400 = vmatmul.mubr.f32.gmra.mxu0 %v90
    %v401 = vpop.f32.mrf.mxu0
    %v402 = vadd.f32 0.0, %v401
    %v403 = vpop.f32.mrf.mxu0
    %404 = vmatprep.mubr.f32.mxu0 0.0
    %405 = vmatmul.mubr.f32.gmra.mxu0 %v91
    %v406 = vpop.f32.mrf.mxu0
    %v407 = vadd.f32 0.0, %v406
    %v408 = vpop.f32.mrf.mxu0
    %409 = vmatprep.mubr.f32.mxu0 0.0
    %410 = vmatmul.mubr.f32.gmra.mxu0 %v92
    %v411 = vpop.f32.mrf.mxu0
    %v412 = vadd.f32 0.0, %v411
    %v413 = vpop.f32.mrf.mxu0
    %414 = vmatprep.mubr.f32.mxu0 0.0
    %415 = vmatmul.mubr.f32.gmra.mxu0 %v93
    %v416 = vpop.f32.mrf.mxu0
    %v417 = vadd.f32 0.0, %v416
    %v418 = vpop.f32.mrf.mxu0
    %419 = vdwg.mxu0
    %vm420 = vcmask 64512
    %v422 = vsel %vm420, 1.0, 0
    %424 = vmatprep.subr.mxu0 0.0
    %425 = vmatpush1.msra.mxu0 %v252
    %426 = vmatprep.subr.mxu0 0.0
    %427 = vmatpush1.msra.mxu0 %v247
    %428 = vmatprep.subr.mxu0 0.0
    %429 = vmatpush1.msra.mxu0 %v242
    %430 = vmatprep.subr.mxu0 0.0
    %431 = vmatpush1.msra.mxu0 %v237
    %432 = vmatprep.subr.mxu0 0.0
    %433 = vmatpush1.msra.mxu0 %v232
    %434 = vmatprep.subr.mxu0 0.0
    %435 = vmatpush1.msra.mxu0 %v227
    %436 = vmatprep.subr.mxu0 0.0
    %437 = vmatpush1.msra.mxu0 %v222
    %438 = vmatprep.subr.mxu0 0.0
    %439 = vmatpush1.msra.mxu0 %v217
    %440 = vmatprep.subr.mxu0 0.0
    %441 = vmatpush1.msra.mxu0 %v212
    %442 = vmatprep.subr.mxu0 0.0
    %443 = vmatpush1.msra.mxu0 %v207
    %444 = vmatprep.subr.mxu0 0.0
    %445 = vmatpush1.msra.mxu0 %v202
    %446 = vmatprep.subr.mxu0 0.0
    %447 = vmatpush1.msra.mxu0 %v197
    %448 = vmatprep.subr.mxu0 0.0
    %449 = vmatpush1.msra.mxu0 %v192
    %450 = vmatprep.subr.mxu0 0.0
    %451 = vmatpush1.msra.mxu0 %v187
    %452 = vmatprep.subr.mxu0 0.0
    %453 = vmatpush1.msra.mxu0 %v182
    %454 = vmatprep.subr.mxu0 0.0
    %455 = vmatpush1.msra.mxu0 %v177
    %456 = vmatprep.subr.mxu0 0.0
    %457 = vmatpush2.msra.mxu0 %v332
    %458 = vmatprep.subr.mxu0 0.0
    %459 = vmatpush2.msra.mxu0 %v327
    %460 = vmatprep.subr.mxu0 0.0
    %461 = vmatpush2.msra.mxu0 %v322
    %462 = vmatprep.subr.mxu0 0.0
    %463 = vmatpush2.msra.mxu0 %v317
    %464 = vmatprep.subr.mxu0 0.0
    %465 = vmatpush2.msra.mxu0 %v312
    %466 = vmatprep.subr.mxu0 0.0
    %467 = vmatpush2.msra.mxu0 %v307
    %468 = vmatprep.subr.mxu0 0.0
    %469 = vmatpush2.msra.mxu0 %v302
    %470 = vmatprep.subr.mxu0 0.0
    %471 = vmatpush2.msra.mxu0 %v297
    %472 = vmatprep.subr.mxu0 0.0
    %473 = vmatpush2.msra.mxu0 %v292
    %474 = vmatprep.subr.mxu0 0.0
    %475 = vmatpush2.msra.mxu0 %v287
    %476 = vmatprep.subr.mxu0 0.0
    %477 = vmatpush2.msra.mxu0 %v282
    %478 = vmatprep.subr.mxu0 0.0
    %479 = vmatpush2.msra.mxu0 %v277
    %480 = vmatprep.subr.mxu0 0.0
    %481 = vmatpush2.msra.mxu0 %v272
    %482 = vmatprep.subr.mxu0 0.0
    %483 = vmatpush2.msra.mxu0 %v267
    %484 = vmatprep.subr.mxu0 0.0
    %485 = vmatpush2.msra.mxu0 %v262
    %486 = vmatprep.subr.mxu0 0.0
    %487 = vmatpush2.msra.mxu0 %v257
    %488 = vmatprep.mubr.f32.mxu0 1.0
    %489 = vmatmul.mubr.f32.gmra.mxu0 1.0
    %v490 = vpop.f32.mrf.mxu0
    %v491 = vadd.f32 0.0, %v490
    %v492 = vpop.f32.mrf.mxu0
    %493 = vdwg.mxu0
    %494 = vmatprep.subr.mxu0 0.0
    %495 = vmatpush1.msra.mxu0 %v412
    %496 = vmatprep.subr.mxu0 0.0
    %497 = vmatpush1.msra.mxu0 %v407
    %498 = vmatprep.subr.mxu0 0.0
    %499 = vmatpush1.msra.mxu0 %v402
    %500 = vmatprep.subr.mxu0 0.0
    %501 = vmatpush1.msra.mxu0 %v397
    %502 = vmatprep.subr.mxu0 0.0
    %503 = vmatpush1.msra.mxu0 %v392
    %504 = vmatprep.subr.mxu0 0.0
    %505 = vmatpush1.msra.mxu0 %v387
    %506 = vmatprep.subr.mxu0 0.0
    %507 = vmatpush1.msra.mxu0 %v382
    %508 = vmatprep.subr.mxu0 0.0
    %509 = vmatpush1.msra.mxu0 %v377
    %510 = vmatprep.subr.mxu0 0.0
    %511 = vmatpush1.msra.mxu0 %v372
    %512 = vmatprep.subr.mxu0 0.0
    %513 = vmatpush1.msra.mxu0 %v367
    %514 = vmatprep.subr.mxu0 0.0
    %515 = vmatpush1.msra.mxu0 %v362
    %516 = vmatprep.subr.mxu0 0.0
    %517 = vmatpush1.msra.mxu0 %v357
    %518 = vmatprep.subr.mxu0 0.0
    %519 = vmatpush1.msra.mxu0 %v352
    %520 = vmatprep.subr.mxu0 0.0
    %521 = vmatpush1.msra.mxu0 %v347
    %522 = vmatprep.subr.mxu0 0.0
    %523 = vmatpush1.msra.mxu0 %v342
    %524 = vmatprep.subr.mxu0 0.0
    %525 = vmatpush1.msra.mxu0 %v337
    %526 = vmatprep.subr.mxu0 0.0
    %527 = vmatpush2.msra.mxu0 0.0
    %528 = vmatprep.subr.mxu0 0.0
    %529 = vmatpush2.msra.mxu0 0.0
    %530 = vmatprep.subr.mxu0 0.0
    %531 = vmatpush2.msra.mxu0 0.0
    %532 = vmatprep.subr.mxu0 0.0
    %533 = vmatpush2.msra.mxu0 0.0
    %534 = vmatprep.subr.mxu0 0.0
    %535 = vmatpush2.msra.mxu0 0.0
    %536 = vmatprep.subr.mxu0 0.0
    %537 = vmatpush2.msra.mxu0 0.0
    %538 = vmatprep.subr.mxu0 0.0
    %539 = vmatpush2.msra.mxu0 0.0
    %540 = vmatprep.subr.mxu0 0.0
    %541 = vmatpush2.msra.mxu0 0.0
    %542 = vmatprep.subr.mxu0 0.0
    %543 = vmatpush2.msra.mxu0 0.0
    %544 = vmatprep.subr.mxu0 0.0
    %545 = vmatpush2.msra.mxu0 0.0
    %546 = vmatprep.subr.mxu0 0.0
    %547 = vmatpush2.msra.mxu0 0.0
    %548 = vmatprep.subr.mxu0 0.0
    %549 = vmatpush2.msra.mxu0 0.0
    %550 = vmatprep.subr.mxu0 0.0
    %551 = vmatpush2.msra.mxu0 0.0
    %552 = vmatprep.subr.mxu0 0.0
    %553 = vmatpush2.msra.mxu0 0.0
    %554 = vmatprep.subr.mxu0 0.0
    %555 = vmatpush2.msra.mxu0 0.0
    %556 = vmatprep.subr.mxu0 0.0
    %557 = vmatpush2.msra.mxu0 %v417
    %558 = vmatprep.mubr.f32.mxu0 %v422
    %559 = vmatmul.mubr.f32.gmra.mxu0 1.0
    %v560 = vpop.f32.mrf.mxu0
    %v561 = vadd.f32 %v491, %v560
    %v562 = vpop.f32.mrf.mxu0
    %563 = vdwg.mxu0
    %v564 = vmul.f32 %v177, %v177
    %v565 = vmul.f32 %v182, %v182
    %v566 = vmul.f32 %v187, %v187
    %v567 = vmul.f32 %v192, %v192
    %v568 = vmul.f32 %v197, %v197
    %v569 = vmul.f32 %v202, %v202
    %v570 = vmul.f32 %v207, %v207
    %v571 = vmul.f32 %v212, %v212
    %v572 = vmul.f32 %v217, %v217
    %v573 = vmul.f32 %v222, %v222
    %v574 = vmul.f32 %v227, %v227
    %v575 = vmul.f32 %v232, %v232
    %v576 = vmul.f32 %v237, %v237
    %v577 = vmul.f32 %v242, %v242
    %v578 = vmul.f32 %v247, %v247
    %v579 = vmul.f32 %v252, %v252
    %v580 = vmul.f32 %v257, %v257
    %v581 = vmul.f32 %v262, %v262
    %v582 = vmul.f32 %v267, %v267
    %v583 = vmul.f32 %v272, %v272
    %v584 = vmul.f32 %v277, %v277
    %v585 = vmul.f32 %v282, %v282
    %v586 = vmul.f32 %v287, %v287
    %v587 = vmul.f32 %v292, %v292
    %v588 = vmul.f32 %v297, %v297
    %v589 = vmul.f32 %v302, %v302
    %v590 = vmul.f32 %v307, %v307
    %v591 = vmul.f32 %v312, %v312
    %v592 = vmul.f32 %v317, %v317
    %v593 = vmul.f32 %v322, %v322
    %v594 = vmul.f32 %v327, %v327
    %v595 = vmul.f32 %v332, %v332
    %v596 = vmul.f32 %v337, %v337
    %v597 = vmul.f32 %v342, %v342
    %v598 = vmul.f32 %v347, %v347
    %v599 = vmul.f32 %v352, %v352
    %v600 = vmul.f32 %v357, %v357
    %v601 = vmul.f32 %v362, %v362
    %v602 = vmul.f32 %v367, %v367
    %v603 = vmul.f32 %v372, %v372
    %v604 = vmul.f32 %v377, %v377
    %v605 = vmul.f32 %v382, %v382
    %v606 = vmul.f32 %v387, %v387
    %v607 = vmul.f32 %v392, %v392
    %v608 = vmul.f32 %v397, %v397
    %v609 = vmul.f32 %v402, %v402
    %v610 = vmul.f32 %v407, %v407
    %v611 = vmul.f32 %v412, %v412
    %v612 = vmul.f32 %v417, %v417
    %613 = vmatprep.subr.mxu0 0.0
    %614 = vmatpush1.msra.mxu0 %v579
    %615 = vmatprep.subr.mxu0 0.0
    %616 = vmatpush1.msra.mxu0 %v578
    %617 = vmatprep.subr.mxu0 0.0
    %618 = vmatpush1.msra.mxu0 %v577
    %619 = vmatprep.subr.mxu0 0.0
    %620 = vmatpush1.msra.mxu0 %v576
    %621 = vmatprep.subr.mxu0 0.0
    %622 = vmatpush1.msra.mxu0 %v575
    %623 = vmatprep.subr.mxu0 0.0
    %624 = vmatpush1.msra.mxu0 %v574
    %625 = vmatprep.subr.mxu0 0.0
    %626 = vmatpush1.msra.mxu0 %v573
    %627 = vmatprep.subr.mxu0 0.0
    %628 = vmatpush1.msra.mxu0 %v572
    %629 = vmatprep.subr.mxu0 0.0
    %630 = vmatpush1.msra.mxu0 %v571
    %631 = vmatprep.subr.mxu0 0.0
    %632 = vmatpush1.msra.mxu0 %v570
    %633 = vmatprep.subr.mxu0 0.0
    %634 = vmatpush1.msra.mxu0 %v569
    %635 = vmatprep.subr.mxu0 0.0
    %636 = vmatpush1.msra.mxu0 %v568
    %637 = vmatprep.subr.mxu0 0.0
    %638 = vmatpush1.msra.mxu0 %v567
    %639 = vmatprep.subr.mxu0 0.0
    %640 = vmatpush1.msra.mxu0 %v566
    %641 = vmatprep.subr.mxu0 0.0
    %642 = vmatpush1.msra.mxu0 %v565
    %643 = vmatprep.subr.mxu0 0.0
    %644 = vmatpush1.msra.mxu0 %v564
    %645 = vmatprep.subr.mxu0 0.0
    %646 = vmatpush2.msra.mxu0 %v595
    %647 = vmatprep.subr.mxu0 0.0
    %648 = vmatpush2.msra.mxu0 %v594
    %649 = vmatprep.subr.mxu0 0.0
    %650 = vmatpush2.msra.mxu0 %v593
    %651 = vmatprep.subr.mxu0 0.0
    %652 = vmatpush2.msra.mxu0 %v592
    %653 = vmatprep.subr.mxu0 0.0
    %654 = vmatpush2.msra.mxu0 %v591
    %655 = vmatprep.subr.mxu0 0.0
    %656 = vmatpush2.msra.mxu0 %v590
    %657 = vmatprep.subr.mxu0 0.0
    %658 = vmatpush2.msra.mxu0 %v589
    %659 = vmatprep.subr.mxu0 0.0
    %660 = vmatpush2.msra.mxu0 %v588
    %661 = vmatprep.subr.mxu0 0.0
    %662 = vmatpush2.msra.mxu0 %v587
    %663 = vmatprep.subr.mxu0 0.0
    %664 = vmatpush2.msra.mxu0 %v586
    %665 = vmatprep.subr.mxu0 0.0
    %666 = vmatpush2.msra.mxu0 %v585
    %667 = vmatprep.subr.mxu0 0.0
    %668 = vmatpush2.msra.mxu0 %v584
    %669 = vmatprep.subr.mxu0 0.0
    %670 = vmatpush2.msra.mxu0 %v583
    %671 = vmatprep.subr.mxu0 0.0
    %672 = vmatpush2.msra.mxu0 %v582
    %673 = vmatprep.subr.mxu0 0.0
    %674 = vmatpush2.msra.mxu0 %v581
    %675 = vmatprep.subr.mxu0 0.0
    %676 = vmatpush2.msra.mxu0 %v580
    %677 = vmatprep.mubr.f32.mxu0 1.0
    %678 = vmatmul.mubr.f32.gmra.mxu0 1.0
    %v679 = vpop.f32.mrf.mxu0
    %v680 = vadd.f32 0.0, %v679
    %v681 = vpop.f32.mrf.mxu0
    %682 = vdwg.mxu0
    %683 = vmatprep.subr.mxu0 0.0
    %684 = vmatpush1.msra.mxu0 %v611
    %685 = vmatprep.subr.mxu0 0.0
    %686 = vmatpush1.msra.mxu0 %v610
    %687 = vmatprep.subr.mxu0 0.0
    %688 = vmatpush1.msra.mxu0 %v609
    %689 = vmatprep.subr.mxu0 0.0
    %690 = vmatpush1.msra.mxu0 %v608
    %691 = vmatprep.subr.mxu0 0.0
    %692 = vmatpush1.msra.mxu0 %v607
    %693 = vmatprep.subr.mxu0 0.0
    %694 = vmatpush1.msra.mxu0 %v606
    %695 = vmatprep.subr.mxu0 0.0
    %696 = vmatpush1.msra.mxu0 %v605
    %697 = vmatprep.subr.mxu0 0.0
    %698 = vmatpush1.msra.mxu0 %v604
    %699 = vmatprep.subr.mxu0 0.0
    %700 = vmatpush1.msra.mxu0 %v603
    %701 = vmatprep.subr.mxu0 0.0
    %702 = vmatpush1.msra.mxu0 %v602
    %703 = vmatprep.subr.mxu0 0.0
    %704 = vmatpush1.msra.mxu0 %v601
    %705 = vmatprep.subr.mxu0 0.0
    %706 = vmatpush1.msra.mxu0 %v600
    %707 = vmatprep.subr.mxu0 0.0
    %708 = vmatpush1.msra.mxu0 %v599
    %709 = vmatprep.subr.mxu0 0.0
    %710 = vmatpush1.msra.mxu0 %v598
    %711 = vmatprep.subr.mxu0 0.0
    %712 = vmatpush1.msra.mxu0 %v597
    %713 = vmatprep.subr.mxu0 0.0
    %714 = vmatpush1.msra.mxu0 %v596
    %715 = vmatprep.subr.mxu0 0.0
    %716 = vmatpush2.msra.mxu0 0.0
    %717 = vmatprep.subr.mxu0 0.0
    %718 = vmatpush2.msra.mxu0 0.0
    %719 = vmatprep.subr.mxu0 0.0
    %720 = vmatpush2.msra.mxu0 0.0
    %721 = vmatprep.subr.mxu0 0.0
    %722 = vmatpush2.msra.mxu0 0.0
    %723 = vmatprep.subr.mxu0 0.0
    %724 = vmatpush2.msra.mxu0 0.0
    %725 = vmatprep.subr.mxu0 0.0
    %726 = vmatpush2.msra.mxu0 0.0
    %727 = vmatprep.subr.mxu0 0.0
    %728 = vmatpush2.msra.mxu0 0.0
    %729 = vmatprep.subr.mxu0 0.0
    %730 = vmatpush2.msra.mxu0 0.0
    %731 = vmatprep.subr.mxu0 0.0
    %732 = vmatpush2.msra.mxu0 0.0
    %733 = vmatprep.subr.mxu0 0.0
    %734 = vmatpush2.msra.mxu0 0.0
    %735 = vmatprep.subr.mxu0 0.0
    %736 = vmatpush2.msra.mxu0 0.0
    %737 = vmatprep.subr.mxu0 0.0
    %738 = vmatpush2.msra.mxu0 0.0
    %739 = vmatprep.subr.mxu0 0.0
    %740 = vmatpush2.msra.mxu0 0.0
    %741 = vmatprep.subr.mxu0 0.0
    %742 = vmatpush2.msra.mxu0 0.0
    %743 = vmatprep.subr.mxu0 0.0
    %744 = vmatpush2.msra.mxu0 0.0
    %745 = vmatprep.subr.mxu0 0.0
    %746 = vmatpush2.msra.mxu0 %v612
    %747 = vmatprep.mubr.f32.mxu0 %v422
    %748 = vmatmul.mubr.f32.gmra.mxu0 1.0
    %v749 = vpop.f32.mrf.mxu0
    %v750 = vadd.f32 %v680, %v749
    %v751 = vpop.f32.mrf.mxu0
    %752 = vdwg.mxu0
    %v753 = vmul.f32 %v561, 0.0025510204
    %v754 = vmul.f32 %v750, 0.0025510204
    %v755 = vmul.f32 %v753, %v753
    %v756 = vsub.f32 %v754, %v755
    %v757 = vld [vmem:[%s2] sm:$0x1]
    %v758 = vadd.f32 %v756, 1e-05
    %v759 = vrsqrt.pop %v758
    %v760 = vmul.f32 %v757, %v759
    %v761 = vld [vmem:[%s3] sm:$0x1]
    %v762 = vmul.f32 %v753, %v760
    %v763 = vsub.f32 %v761, %v762
    %v765 = vlaneseq
    %v766 = vshrl.u32 %v765, 7
    %v767 = vsub.s32 0, %v766
    %v768 = vrot.slane %v760, %v767
    %v770 = vmul.f32 %v177, %v768
    %v771 = vmul.f32 %v182, %v768
    %v772 = vmul.f32 %v187, %v768
    %v773 = vmul.f32 %v192, %v768
    %v774 = vmul.f32 %v197, %v768
    %v775 = vmul.f32 %v202, %v768
    %v776 = vmul.f32 %v207, %v768
    %v777 = vmul.f32 %v212, %v768
    %v778 = vmul.f32 %v217, %v768
    %v779 = vmul.f32 %v222, %v768
    %v780 = vmul.f32 %v227, %v768
    %v781 = vmul.f32 %v232, %v768
    %v782 = vmul.f32 %v237, %v768
    %v783 = vmul.f32 %v242, %v768
    %v784 = vmul.f32 %v247, %v768
    %v785 = vmul.f32 %v252, %v768
    %v786 = vmul.f32 %v257, %v768
    %v787 = vmul.f32 %v262, %v768
    %v788 = vmul.f32 %v267, %v768
    %v789 = vmul.f32 %v272, %v768
    %v790 = vmul.f32 %v277, %v768
    %v791 = vmul.f32 %v282, %v768
    %v792 = vmul.f32 %v287, %v768
    %v793 = vmul.f32 %v297, %v768
    %v794 = vmul.f32 %v302, %v768
    %v795 = vmul.f32 %v307, %v768
    %v796 = vmul.f32 %v312, %v768
    %v797 = vmul.f32 %v317, %v768
    %v798 = vmul.f32 %v322, %v768
    %v799 = vmul.f32 %v327, %v768
    %v800 = vmul.f32 %v332, %v768
    %v801 = vmul.f32 %v337, %v768
    %v802 = vmul.f32 %v342, %v768
    %v803 = vmul.f32 %v347, %v768
    %v804 = vmul.f32 %v352, %v768
    %v805 = vmul.f32 %v357, %v768
    %v806 = vmul.f32 %v362, %v768
    %v807 = vmul.f32 %v367, %v768
    %v808 = vmul.f32 %v372, %v768
    %v809 = vmul.f32 %v377, %v768
    %v810 = vmul.f32 %v382, %v768
    %v811 = vmul.f32 %v387, %v768
    %v812 = vmul.f32 %v392, %v768
    %v813 = vmul.f32 %v397, %v768
    %v814 = vmul.f32 %v402, %v768
    %v815 = vmul.f32 %v407, %v768
    %v816 = vmul.f32 %v412, %v768
    %v818 = vlaneseq
    %v819 = vshrl.u32 %v818, 7
    %v820 = vsub.s32 0, %v819
    %v821 = vrot.slane %v763, %v820
    %v823 = vadd.f32 %v770, %v821
    %v824 = vadd.f32 %v771, %v821
    %v825 = vadd.f32 %v772, %v821
    %v826 = vadd.f32 %v773, %v821
    %v827 = vadd.f32 %v774, %v821
    %v828 = vadd.f32 %v775, %v821
    %v829 = vadd.f32 %v776, %v821
    %v830 = vadd.f32 %v777, %v821
    %v831 = vadd.f32 %v778, %v821
    %v832 = vadd.f32 %v779, %v821
    %v833 = vadd.f32 %v780, %v821
    %v834 = vadd.f32 %v781, %v821
    %v835 = vadd.f32 %v782, %v821
    %v836 = vadd.f32 %v783, %v821
    %v837 = vadd.f32 %v784, %v821
    %v838 = vadd.f32 %v785, %v821
    %v839 = vadd.f32 %v786, %v821
    %v840 = vadd.f32 %v787, %v821
    %v841 = vadd.f32 %v788, %v821
    %v842 = vadd.f32 %v789, %v821
    %v843 = vadd.f32 %v790, %v821
    %v844 = vadd.f32 %v791, %v821
    %v845 = vadd.f32 %v792, %v821
    %v846 = vadd.f32 %v793, %v821
    %v847 = vadd.f32 %v794, %v821
    %v848 = vadd.f32 %v795, %v821
    %v849 = vadd.f32 %v796, %v821
    %v850 = vadd.f32 %v797, %v821
    %v851 = vadd.f32 %v798, %v821
    %v852 = vadd.f32 %v799, %v821
    %v853 = vadd.f32 %v800, %v821
    %v854 = vadd.f32 %v801, %v821
    %v855 = vadd.f32 %v802, %v821
    %v856 = vadd.f32 %v803, %v821
    %v857 = vadd.f32 %v804, %v821
    %v858 = vadd.f32 %v805, %v821
    %v859 = vadd.f32 %v806, %v821
    %v860 = vadd.f32 %v807, %v821
    %v861 = vadd.f32 %v808, %v821
    %v862 = vadd.f32 %v809, %v821
    %v863 = vadd.f32 %v810, %v821
    %v864 = vadd.f32 %v811, %v821
    %v865 = vadd.f32 %v812, %v821
    %v866 = vadd.f32 %v813, %v821
    %v867 = vadd.f32 %v814, %v821
    %v868 = vadd.f32 %v815, %v821
    %v869 = vadd.f32 %v816, %v821
    %v870 = vmax.f32 %v823, 0.0
    %v871 = vmax.f32 %v824, 0.0
    %v872 = vmax.f32 %v825, 0.0
    %v873 = vmax.f32 %v826, 0.0
    %v874 = vmax.f32 %v827, 0.0
    %v875 = vmax.f32 %v828, 0.0
    %v876 = vmax.f32 %v829, 0.0
    %v877 = vmax.f32 %v830, 0.0
    %v878 = vmax.f32 %v831, 0.0
    %v879 = vmax.f32 %v832, 0.0
    %v880 = vmax.f32 %v833, 0.0
    %v881 = vmax.f32 %v834, 0.0
    %v882 = vmax.f32 %v835, 0.0
    %v883 = vmax.f32 %v836, 0.0
    %v884 = vmax.f32 %v837, 0.0
    %v885 = vmax.f32 %v838, 0.0
    %v886 = vmax.f32 %v839, 0.0
    %v887 = vmax.f32 %v840, 0.0
    %v888 = vmax.f32 %v841, 0.0
    %v889 = vmax.f32 %v842, 0.0
    %v890 = vmax.f32 %v843, 0.0
    %v891 = vmax.f32 %v844, 0.0
    %v892 = vmax.f32 %v845, 0.0
    %v893 = vmax.f32 %v846, 0.0
    %v894 = vmax.f32 %v847, 0.0
    %v895 = vmax.f32 %v848, 0.0
    %v896 = vmax.f32 %v849, 0.0
    %v897 = vmax.f32 %v850, 0.0
    %v898 = vmax.f32 %v851, 0.0
    %v899 = vmax.f32 %v852, 0.0
    %v900 = vmax.f32 %v853, 0.0
    %v901 = vmax.f32 %v854, 0.0
    %v902 = vmax.f32 %v855, 0.0
    %v903 = vmax.f32 %v856, 0.0
    %v904 = vmax.f32 %v857, 0.0
    %v905 = vmax.f32 %v858, 0.0
    %v906 = vmax.f32 %v859, 0.0
    %v907 = vmax.f32 %v860, 0.0
    %v908 = vmax.f32 %v861, 0.0
    %v909 = vmax.f32 %v862, 0.0
    %v910 = vmax.f32 %v863, 0.0
    %v911 = vmax.f32 %v864, 0.0
    %v912 = vmax.f32 %v865, 0.0
    %v913 = vmax.f32 %v866, 0.0
    %v914 = vmax.f32 %v867, 0.0
    %v915 = vmax.f32 %v868, 0.0
    %v916 = vmax.f32 %v869, 0.0
    %v964 = vcombine.high %v870, %v870
    %v966 = vunpack.c.l.s4 1983009808
    %v967 = vunpack.c.0.s8 %v966
    %v968 = vlaneseq
    %v969 = vshrl.u32 %v968, 7
    %v970 = vsub.s32 %v967, %v969
    %v971 = vrot.slane %v870, %v970
    %v973 = vunpack.c.l.s4 1983009808
    %v974 = vunpack.c.0.s8 %v973
    %v975 = vlaneseq
    %v976 = vshrl.u32 %v975, 7
    %v977 = vsub.s32 %v974, %v976
    %v978 = vrot.slane %v964, %v977
    %v979 = vcombine.high %v971, %v971
    %v980 = vcombine.high %v978, %v978
    %v981 = vcombine.high %v871, %v871
    %v983 = vunpack.c.l.s4 1983009808
    %v984 = vunpack.c.0.s8 %v983
    %v985 = vlaneseq
    %v986 = vshrl.u32 %v985, 7
    %v987 = vsub.s32 %v984, %v986
    %v988 = vrot.slane %v871, %v987
    %v990 = vunpack.c.l.s4 1983009808
    %v991 = vunpack.c.0.s8 %v990
    %v992 = vlaneseq
    %v993 = vshrl.u32 %v992, 7
    %v994 = vsub.s32 %v991, %v993
    %v995 = vrot.slane %v981, %v994
    %v996 = vcombine.high %v988, %v988
    %v997 = vcombine.high %v995, %v995
    %v998 = vcombine.high %v872, %v872
    %v1000 = vunpack.c.l.s4 1983009808
    %v1001 = vunpack.c.0.s8 %v1000
    %v1002 = vlaneseq
    %v1003 = vshrl.u32 %v1002, 7
    %v1004 = vsub.s32 %v1001, %v1003
    %v1005 = vrot.slane %v872, %v1004
    %v1007 = vunpack.c.l.s4 1983009808
    %v1008 = vunpack.c.0.s8 %v1007
    %v1009 = vlaneseq
    %v1010 = vshrl.u32 %v1009, 7
    %v1011 = vsub.s32 %v1008, %v1010
    %v1012 = vrot.slane %v998, %v1011
    %v1013 = vcombine.high %v1005, %v1005
    %v1014 = vcombine.high %v1012, %v1012
    %v1015 = vcombine.high %v873, %v873
    %v1017 = vunpack.c.l.s4 1983009808
    %v1018 = vunpack.c.0.s8 %v1017
    %v1019 = vlaneseq
    %v1020 = vshrl.u32 %v1019, 7
    %v1021 = vsub.s32 %v1018, %v1020
    %v1022 = vrot.slane %v873, %v1021
    %v1024 = vunpack.c.l.s4 1983009808
    %v1025 = vunpack.c.0.s8 %v1024
    %v1026 = vlaneseq
    %v1027 = vshrl.u32 %v1026, 7
    %v1028 = vsub.s32 %v1025, %v1027
    %v1029 = vrot.slane %v1015, %v1028
    %v1030 = vcombine.high %v1022, %v1022
    %v1031 = vcombine.high %v1029, %v1029
    %v1032 = vcombine.high %v874, %v874
    %v1034 = vunpack.c.l.s4 1983009808
    %v1035 = vunpack.c.0.s8 %v1034
    %v1036 = vlaneseq
    %v1037 = vshrl.u32 %v1036, 7
    %v1038 = vsub.s32 %v1035, %v1037
    %v1039 = vrot.slane %v874, %v1038
    %v1041 = vunpack.c.l.s4 1983009808
    %v1042 = vunpack.c.0.s8 %v1041
    %v1043 = vlaneseq
    %v1044 = vshrl.u32 %v1043, 7
    %v1045 = vsub.s32 %v1042, %v1044
    %v1046 = vrot.slane %v1032, %v1045
    %v1047 = vcombine.high %v1039, %v1039
    %v1048 = vcombine.high %v1046, %v1046
    %v1049 = vcombine.high %v875, %v875
    %v1051 = vunpack.c.l.s4 1983009808
    %v1052 = vunpack.c.0.s8 %v1051
    %v1053 = vlaneseq
    %v1054 = vshrl.u32 %v1053, 7
    %v1055 = vsub.s32 %v1052, %v1054
    %v1056 = vrot.slane %v875, %v1055
    %v1058 = vunpack.c.l.s4 1983009808
    %v1059 = vunpack.c.0.s8 %v1058
    %v1060 = vlaneseq
    %v1061 = vshrl.u32 %v1060, 7
    %v1062 = vsub.s32 %v1059, %v1061
    %v1063 = vrot.slane %v1049, %v1062
    %v1064 = vcombine.high %v1056, %v1056
    %v1065 = vcombine.high %v1063, %v1063
    %v1066 = vcombine.high %v876, %v876
    %v1068 = vunpack.c.l.s4 1983009808
    %v1069 = vunpack.c.0.s8 %v1068
    %v1070 = vlaneseq
    %v1071 = vshrl.u32 %v1070, 7
    %v1072 = vsub.s32 %v1069, %v1071
    %v1073 = vrot.slane %v876, %v1072
    %v1075 = vunpack.c.l.s4 1983009808
    %v1076 = vunpack.c.0.s8 %v1075
    %v1077 = vlaneseq
    %v1078 = vshrl.u32 %v1077, 7
    %v1079 = vsub.s32 %v1076, %v1078
    %v1080 = vrot.slane %v1066, %v1079
    %v1081 = vcombine.high %v1073, %v1073
    %v1082 = vcombine.high %v1080, %v1080
    %v1083 = vcombine.high %v877, %v877
    %v1085 = vunpack.c.l.s4 1983009808
    %v1086 = vunpack.c.0.s8 %v1085
    %v1087 = vlaneseq
    %v1088 = vshrl.u32 %v1087, 7
    %v1089 = vsub.s32 %v1086, %v1088
    %v1090 = vrot.slane %v877, %v1089
    %v1092 = vunpack.c.l.s4 1983009808
    %v1093 = vunpack.c.0.s8 %v1092
    %v1094 = vlaneseq
    %v1095 = vshrl.u32 %v1094, 7
    %v1096 = vsub.s32 %v1093, %v1095
    %v1097 = vrot.slane %v1083, %v1096
    %v1098 = vcombine.high %v1090, %v1090
    %v1099 = vcombine.high %v1097, %v1097
    %v1100 = vcombine.high %v878, %v878
    %v1102 = vunpack.c.l.s4 1983009808
    %v1103 = vunpack.c.0.s8 %v1102
    %v1104 = vlaneseq
    %v1105 = vshrl.u32 %v1104, 7
    %v1106 = vsub.s32 %v1103, %v1105
    %v1107 = vrot.slane %v878, %v1106
    %v1109 = vunpack.c.l.s4 1983009808
    %v1110 = vunpack.c.0.s8 %v1109
    %v1111 = vlaneseq
    %v1112 = vshrl.u32 %v1111, 7
    %v1113 = vsub.s32 %v1110, %v1112
    %v1114 = vrot.slane %v1100, %v1113
    %v1115 = vcombine.high %v1107, %v1107
    %v1116 = vcombine.high %v1114, %v1114
    %v1117 = vcombine.high %v879, %v879
    %v1119 = vunpack.c.l.s4 1983009808
    %v1120 = vunpack.c.0.s8 %v1119
    %v1121 = vlaneseq
    %v1122 = vshrl.u32 %v1121, 7
    %v1123 = vsub.s32 %v1120, %v1122
    %v1124 = vrot.slane %v879, %v1123
    %v1126 = vunpack.c.l.s4 1983009808
    %v1127 = vunpack.c.0.s8 %v1126
    %v1128 = vlaneseq
    %v1129 = vshrl.u32 %v1128, 7
    %v1130 = vsub.s32 %v1127, %v1129
    %v1131 = vrot.slane %v1117, %v1130
    %v1132 = vcombine.high %v1124, %v1124
    %v1133 = vcombine.high %v1131, %v1131
    %v1134 = vcombine.high %v880, %v880
    %v1136 = vunpack.c.l.s4 1983009808
    %v1137 = vunpack.c.0.s8 %v1136
    %v1138 = vlaneseq
    %v1139 = vshrl.u32 %v1138, 7
    %v1140 = vsub.s32 %v1137, %v1139
    %v1141 = vrot.slane %v880, %v1140
    %v1143 = vunpack.c.l.s4 1983009808
    %v1144 = vunpack.c.0.s8 %v1143
    %v1145 = vlaneseq
    %v1146 = vshrl.u32 %v1145, 7
    %v1147 = vsub.s32 %v1144, %v1146
    %v1148 = vrot.slane %v1134, %v1147
    %v1149 = vcombine.high %v1141, %v1141
    %v1150 = vcombine.high %v1148, %v1148
    %v1151 = vcombine.high %v881, %v881
    %v1153 = vunpack.c.l.s4 1983009808
    %v1154 = vunpack.c.0.s8 %v1153
    %v1155 = vlaneseq
    %v1156 = vshrl.u32 %v1155, 7
    %v1157 = vsub.s32 %v1154, %v1156
    %v1158 = vrot.slane %v881, %v1157
    %v1160 = vunpack.c.l.s4 1983009808
    %v1161 = vunpack.c.0.s8 %v1160
    %v1162 = vlaneseq
    %v1163 = vshrl.u32 %v1162, 7
    %v1164 = vsub.s32 %v1161, %v1163
    %v1165 = vrot.slane %v1151, %v1164
    %v1166 = vcombine.high %v1158, %v1158
    %v1167 = vcombine.high %v1165, %v1165
    %v1168 = vcombine.high %v882, %v882
    %v1170 = vunpack.c.l.s4 1983009808
    %v1171 = vunpack.c.0.s8 %v1170
    %v1172 = vlaneseq
    %v1173 = vshrl.u32 %v1172, 7
    %v1174 = vsub.s32 %v1171, %v1173
    %v1175 = vrot.slane %v882, %v1174
    %v1177 = vunpack.c.l.s4 1983009808
    %v1178 = vunpack.c.0.s8 %v1177
    %v1179 = vlaneseq
    %v1180 = vshrl.u32 %v1179, 7
    %v1181 = vsub.s32 %v1178, %v1180
    %v1182 = vrot.slane %v1168, %v1181
    %v1183 = vcombine.high %v1175, %v1175
    %v1184 = vcombine.high %v1182, %v1182
    %v1185 = vcombine.high %v883, %v883
    %v1187 = vunpack.c.l.s4 1983009808
    %v1188 = vunpack.c.0.s8 %v1187
    %v1189 = vlaneseq
    %v1190 = vshrl.u32 %v1189, 7
    %v1191 = vsub.s32 %v1188, %v1190
    %v1192 = vrot.slane %v883, %v1191
    %v1194 = vunpack.c.l.s4 1983009808
    %v1195 = vunpack.c.0.s8 %v1194
    %v1196 = vlaneseq
    %v1197 = vshrl.u32 %v1196, 7
    %v1198 = vsub.s32 %v1195, %v1197
    %v1199 = vrot.slane %v1185, %v1198
    %v1200 = vcombine.high %v1192, %v1192
    %v1201 = vcombine.high %v1199, %v1199
    %v1202 = vcombine.high %v884, %v884
    %v1204 = vunpack.c.l.s4 1983009808
    %v1205 = vunpack.c.0.s8 %v1204
    %v1206 = vlaneseq
    %v1207 = vshrl.u32 %v1206, 7
    %v1208 = vsub.s32 %v1205, %v1207
    %v1209 = vrot.slane %v884, %v1208
    %v1211 = vunpack.c.l.s4 1983009808
    %v1212 = vunpack.c.0.s8 %v1211
    %v1213 = vlaneseq
    %v1214 = vshrl.u32 %v1213, 7
    %v1215 = vsub.s32 %v1212, %v1214
    %v1216 = vrot.slane %v1202, %v1215
    %v1217 = vcombine.high %v1209, %v1209
    %v1218 = vcombine.high %v1216, %v1216
    %v1219 = vcombine.high %v885, %v885
    %v1221 = vunpack.c.l.s4 1983009808
    %v1222 = vunpack.c.0.s8 %v1221
    %v1223 = vlaneseq
    %v1224 = vshrl.u32 %v1223, 7
    %v1225 = vsub.s32 %v1222, %v1224
    %v1226 = vrot.slane %v885, %v1225
    %v1228 = vunpack.c.l.s4 1983009808
    %v1229 = vunpack.c.0.s8 %v1228
    %v1230 = vlaneseq
    %v1231 = vshrl.u32 %v1230, 7
    %v1232 = vsub.s32 %v1229, %v1231
    %v1233 = vrot.slane %v1219, %v1232
    %v1234 = vcombine.high %v1226, %v1226
    %v1235 = vcombine.high %v1233, %v1233
    %v1236 = vcombine.high %v886, %v886
    %v1238 = vunpack.c.l.s4 1983009808
    %v1239 = vunpack.c.0.s8 %v1238
    %v1240 = vlaneseq
    %v1241 = vshrl.u32 %v1240, 7
    %v1242 = vsub.s32 %v1239, %v1241
    %v1243 = vrot.slane %v886, %v1242
    %v1245 = vunpack.c.l.s4 1983009808
    %v1246 = vunpack.c.0.s8 %v1245
    %v1247 = vlaneseq
    %v1248 = vshrl.u32 %v1247, 7
    %v1249 = vsub.s32 %v1246, %v1248
    %v1250 = vrot.slane %v1236, %v1249
    %v1251 = vcombine.high %v1243, %v1243
    %v1252 = vcombine.high %v1250, %v1250
    %v1253 = vcombine.high %v887, %v887
    %v1255 = vunpack.c.l.s4 1983009808
    %v1256 = vunpack.c.0.s8 %v1255
    %v1257 = vlaneseq
    %v1258 = vshrl.u32 %v1257, 7
    %v1259 = vsub.s32 %v1256, %v1258
    %v1260 = vrot.slane %v887, %v1259
    %v1262 = vunpack.c.l.s4 1983009808
    %v1263 = vunpack.c.0.s8 %v1262
    %v1264 = vlaneseq
    %v1265 = vshrl.u32 %v1264, 7
    %v1266 = vsub.s32 %v1263, %v1265
    %v1267 = vrot.slane %v1253, %v1266
    %v1268 = vcombine.high %v1260, %v1260
    %v1269 = vcombine.high %v1267, %v1267
    %v1270 = vcombine.high %v888, %v888
    %v1272 = vunpack.c.l.s4 1983009808
    %v1273 = vunpack.c.0.s8 %v1272
    %v1274 = vlaneseq
    %v1275 = vshrl.u32 %v1274, 7
    %v1276 = vsub.s32 %v1273, %v1275
    %v1277 = vrot.slane %v888, %v1276
    %v1279 = vunpack.c.l.s4 1983009808
    %v1280 = vunpack.c.0.s8 %v1279
    %v1281 = vlaneseq
    %v1282 = vshrl.u32 %v1281, 7
    %v1283 = vsub.s32 %v1280, %v1282
    %v1284 = vrot.slane %v1270, %v1283
    %v1285 = vcombine.high %v1277, %v1277
    %v1286 = vcombine.high %v1284, %v1284
    %v1287 = vcombine.high %v889, %v889
    %v1289 = vunpack.c.l.s4 1983009808
    %v1290 = vunpack.c.0.s8 %v1289
    %v1291 = vlaneseq
    %v1292 = vshrl.u32 %v1291, 7
    %v1293 = vsub.s32 %v1290, %v1292
    %v1294 = vrot.slane %v889, %v1293
    %v1296 = vunpack.c.l.s4 1983009808
    %v1297 = vunpack.c.0.s8 %v1296
    %v1298 = vlaneseq
    %v1299 = vshrl.u32 %v1298, 7
    %v1300 = vsub.s32 %v1297, %v1299
    %v1301 = vrot.slane %v1287, %v1300
    %v1302 = vcombine.high %v1294, %v1294
    %v1303 = vcombine.high %v1301, %v1301
    %v1304 = vcombine.high %v890, %v890
    %v1306 = vunpack.c.l.s4 1983009808
    %v1307 = vunpack.c.0.s8 %v1306
    %v1308 = vlaneseq
    %v1309 = vshrl.u32 %v1308, 7
    %v1310 = vsub.s32 %v1307, %v1309
    %v1311 = vrot.slane %v890, %v1310
    %v1313 = vunpack.c.l.s4 1983009808
    %v1314 = vunpack.c.0.s8 %v1313
    %v1315 = vlaneseq
    %v1316 = vshrl.u32 %v1315, 7
    %v1317 = vsub.s32 %v1314, %v1316
    %v1318 = vrot.slane %v1304, %v1317
    %v1319 = vcombine.high %v1311, %v1311
    %v1320 = vcombine.high %v1318, %v1318
    %v1321 = vcombine.high %v891, %v891
    %v1323 = vunpack.c.l.s4 1983009808
    %v1324 = vunpack.c.0.s8 %v1323
    %v1325 = vlaneseq
    %v1326 = vshrl.u32 %v1325, 7
    %v1327 = vsub.s32 %v1324, %v1326
    %v1328 = vrot.slane %v891, %v1327
    %v1330 = vunpack.c.l.s4 1983009808
    %v1331 = vunpack.c.0.s8 %v1330
    %v1332 = vlaneseq
    %v1333 = vshrl.u32 %v1332, 7
    %v1334 = vsub.s32 %v1331, %v1333
    %v1335 = vrot.slane %v1321, %v1334
    %v1336 = vcombine.high %v1328, %v1328
    %v1337 = vcombine.high %v1335, %v1335
    %v1338 = vcombine.high %v892, %v892
    %v1340 = vunpack.c.l.s4 1983009808
    %v1341 = vunpack.c.0.s8 %v1340
    %v1342 = vlaneseq
    %v1343 = vshrl.u32 %v1342, 7
    %v1344 = vsub.s32 %v1341, %v1343
    %v1345 = vrot.slane %v892, %v1344
    %v1347 = vunpack.c.l.s4 1983009808
    %v1348 = vunpack.c.0.s8 %v1347
    %v1349 = vlaneseq
    %v1350 = vshrl.u32 %v1349, 7
    %v1351 = vsub.s32 %v1348, %v1350
    %v1352 = vrot.slane %v1338, %v1351
    %v1353 = vcombine.high %v1345, %v1345
    %v1354 = vcombine.high %v893, %v893
    %v1356 = vunpack.c.l.s4 1983009808
    %v1357 = vunpack.c.0.s8 %v1356
    %v1358 = vlaneseq
    %v1359 = vshrl.u32 %v1358, 7
    %v1360 = vsub.s32 %v1357, %v1359
    %v1361 = vrot.slane %v1354, %v1360
    %v1362 = vcombine.high %v1361, %v1361
    %v1363 = vcombine.high %v894, %v894
    %v1365 = vunpack.c.l.s4 1983009808
    %v1366 = vunpack.c.0.s8 %v1365
    %v1367 = vlaneseq
    %v1368 = vshrl.u32 %v1367, 7
    %v1369 = vsub.s32 %v1366, %v1368
    %v1370 = vrot.slane %v894, %v1369
    %v1372 = vunpack.c.l.s4 1983009808
    %v1373 = vunpack.c.0.s8 %v1372
    %v1374 = vlaneseq
    %v1375 = vshrl.u32 %v1374, 7
    %v1376 = vsub.s32 %v1373, %v1375
    %v1377 = vrot.slane %v1363, %v1376
    %v1378 = vcombine.high %v1370, %v1370
    %v1379 = vcombine.high %v1377, %v1377
    %v1380 = vcombine.high %v895, %v895
    %v1382 = vunpack.c.l.s4 1983009808
    %v1383 = vunpack.c.0.s8 %v1382
    %v1384 = vlaneseq
    %v1385 = vshrl.u32 %v1384, 7
    %v1386 = vsub.s32 %v1383, %v1385
    %v1387 = vrot.slane %v895, %v1386
    %v1389 = vunpack.c.l.s4 1983009808
    %v1390 = vunpack.c.0.s8 %v1389
    %v1391 = vlaneseq
    %v1392 = vshrl.u32 %v1391, 7
    %v1393 = vsub.s32 %v1390, %v1392
    %v1394 = vrot.slane %v1380, %v1393
    %v1395 = vcombine.high %v1387, %v1387
    %v1396 = vcombine.high %v1394, %v1394
    %v1397 = vcombine.high %v896, %v896
    %v1399 = vunpack.c.l.s4 1983009808
    %v1400 = vunpack.c.0.s8 %v1399
    %v1401 = vlaneseq
    %v1402 = vshrl.u32 %v1401, 7
    %v1403 = vsub.s32 %v1400, %v1402
    %v1404 = vrot.slane %v896, %v1403
    %v1406 = vunpack.c.l.s4 1983009808
    %v1407 = vunpack.c.0.s8 %v1406
    %v1408 = vlaneseq
    %v1409 = vshrl.u32 %v1408, 7
    %v1410 = vsub.s32 %v1407, %v1409
    %v1411 = vrot.slane %v1397, %v1410
    %v1412 = vcombine.high %v1404, %v1404
    %v1413 = vcombine.high %v1411, %v1411
    %v1414 = vcombine.high %v897, %v897
    %v1416 = vunpack.c.l.s4 1983009808
    %v1417 = vunpack.c.0.s8 %v1416
    %v1418 = vlaneseq
    %v1419 = vshrl.u32 %v1418, 7
    %v1420 = vsub.s32 %v1417, %v1419
    %v1421 = vrot.slane %v897, %v1420
    %v1423 = vunpack.c.l.s4 1983009808
    %v1424 = vunpack.c.0.s8 %v1423
    %v1425 = vlaneseq
    %v1426 = vshrl.u32 %v1425, 7
    %v1427 = vsub.s32 %v1424, %v1426
    %v1428 = vrot.slane %v1414, %v1427
    %v1429 = vcombine.high %v1421, %v1421
    %v1430 = vcombine.high %v1428, %v1428
    %v1431 = vcombine.high %v898, %v898
    %v1433 = vunpack.c.l.s4 1983009808
    %v1434 = vunpack.c.0.s8 %v1433
    %v1435 = vlaneseq
    %v1436 = vshrl.u32 %v1435, 7
    %v1437 = vsub.s32 %v1434, %v1436
    %v1438 = vrot.slane %v898, %v1437
    %v1440 = vunpack.c.l.s4 1983009808
    %v1441 = vunpack.c.0.s8 %v1440
    %v1442 = vlaneseq
    %v1443 = vshrl.u32 %v1442, 7
    %v1444 = vsub.s32 %v1441, %v1443
    %v1445 = vrot.slane %v1431, %v1444
    %v1446 = vcombine.high %v1438, %v1438
    %v1447 = vcombine.high %v1445, %v1445
    %v1448 = vcombine.high %v899, %v899
    %v1450 = vunpack.c.l.s4 1983009808
    %v1451 = vunpack.c.0.s8 %v1450
    %v1452 = vlaneseq
    %v1453 = vshrl.u32 %v1452, 7
    %v1454 = vsub.s32 %v1451, %v1453
    %v1455 = vrot.slane %v899, %v1454
    %v1457 = vunpack.c.l.s4 1983009808
    %v1458 = vunpack.c.0.s8 %v1457
    %v1459 = vlaneseq
    %v1460 = vshrl.u32 %v1459, 7
    %v1461 = vsub.s32 %v1458, %v1460
    %v1462 = vrot.slane %v1448, %v1461
    %v1463 = vcombine.high %v1455, %v1455
    %v1464 = vcombine.high %v1462, %v1462
    %v1465 = vcombine.high %v900, %v900
    %v1467 = vunpack.c.l.s4 1983009808
    %v1468 = vunpack.c.0.s8 %v1467
    %v1469 = vlaneseq
    %v1470 = vshrl.u32 %v1469, 7
    %v1471 = vsub.s32 %v1468, %v1470
    %v1472 = vrot.slane %v900, %v1471
    %v1474 = vunpack.c.l.s4 1983009808
    %v1475 = vunpack.c.0.s8 %v1474
    %v1476 = vlaneseq
    %v1477 = vshrl.u32 %v1476, 7
    %v1478 = vsub.s32 %v1475, %v1477
    %v1479 = vrot.slane %v1465, %v1478
    %v1480 = vcombine.high %v1472, %v1472
    %v1481 = vcombine.high %v1479, %v1479
    %v1482 = vcombine.high %v901, %v901
    %v1484 = vunpack.c.l.s4 1983009808
    %v1485 = vunpack.c.0.s8 %v1484
    %v1486 = vlaneseq
    %v1487 = vshrl.u32 %v1486, 7
    %v1488 = vsub.s32 %v1485, %v1487
    %v1489 = vrot.slane %v901, %v1488
    %v1491 = vunpack.c.l.s4 1983009808
    %v1492 = vunpack.c.0.s8 %v1491
    %v1493 = vlaneseq
    %v1494 = vshrl.u32 %v1493, 7
    %v1495 = vsub.s32 %v1492, %v1494
    %v1496 = vrot.slane %v1482, %v1495
    %v1497 = vcombine.high %v1489, %v1489
    %v1498 = vcombine.high %v1496, %v1496
    %v1499 = vcombine.high %v902, %v902
    %v1501 = vunpack.c.l.s4 1983009808
    %v1502 = vunpack.c.0.s8 %v1501
    %v1503 = vlaneseq
    %v1504 = vshrl.u32 %v1503, 7
    %v1505 = vsub.s32 %v1502, %v1504
    %v1506 = vrot.slane %v902, %v1505
    %v1508 = vunpack.c.l.s4 1983009808
    %v1509 = vunpack.c.0.s8 %v1508
    %v1510 = vlaneseq
    %v1511 = vshrl.u32 %v1510, 7
    %v1512 = vsub.s32 %v1509, %v1511
    %v1513 = vrot.slane %v1499, %v1512
    %v1514 = vcombine.high %v1506, %v1506
    %v1515 = vcombine.high %v1513, %v1513
    %v1516 = vcombine.high %v903, %v903
    %v1518 = vunpack.c.l.s4 1983009808
    %v1519 = vunpack.c.0.s8 %v1518
    %v1520 = vlaneseq
    %v1521 = vshrl.u32 %v1520, 7
    %v1522 = vsub.s32 %v1519, %v1521
    %v1523 = vrot.slane %v903, %v1522
    %v1525 = vunpack.c.l.s4 1983009808
    %v1526 = vunpack.c.0.s8 %v1525
    %v1527 = vlaneseq
    %v1528 = vshrl.u32 %v1527, 7
    %v1529 = vsub.s32 %v1526, %v1528
    %v1530 = vrot.slane %v1516, %v1529
    %v1531 = vcombine.high %v1523, %v1523
    %v1532 = vcombine.high %v1530, %v1530
    %v1533 = vcombine.high %v904, %v904
    %v1535 = vunpack.c.l.s4 1983009808
    %v1536 = vunpack.c.0.s8 %v1535
    %v1537 = vlaneseq
    %v1538 = vshrl.u32 %v1537, 7
    %v1539 = vsub.s32 %v1536, %v1538
    %v1540 = vrot.slane %v904, %v1539
    %v1542 = vunpack.c.l.s4 1983009808
    %v1543 = vunpack.c.0.s8 %v1542
    %v1544 = vlaneseq
    %v1545 = vshrl.u32 %v1544, 7
    %v1546 = vsub.s32 %v1543, %v1545
    %v1547 = vrot.slane %v1533, %v1546
    %v1548 = vcombine.high %v1540, %v1540
    %v1549 = vcombine.high %v1547, %v1547
    %v1550 = vcombine.high %v905, %v905
    %v1552 = vunpack.c.l.s4 1983009808
    %v1553 = vunpack.c.0.s8 %v1552
    %v1554 = vlaneseq
    %v1555 = vshrl.u32 %v1554, 7
    %v1556 = vsub.s32 %v1553, %v1555
    %v1557 = vrot.slane %v905, %v1556
    %v1559 = vunpack.c.l.s4 1983009808
    %v1560 = vunpack.c.0.s8 %v1559
    %v1561 = vlaneseq
    %v1562 = vshrl.u32 %v1561, 7
    %v1563 = vsub.s32 %v1560, %v1562
    %v1564 = vrot.slane %v1550, %v1563
    %v1565 = vcombine.high %v1557, %v1557
    %v1566 = vcombine.high %v1564, %v1564
    %v1567 = vcombine.high %v906, %v906
    %v1569 = vunpack.c.l.s4 1983009808
    %v1570 = vunpack.c.0.s8 %v1569
    %v1571 = vlaneseq
    %v1572 = vshrl.u32 %v1571, 7
    %v1573 = vsub.s32 %v1570, %v1572
    %v1574 = vrot.slane %v906, %v1573
    %v1576 = vunpack.c.l.s4 1983009808
    %v1577 = vunpack.c.0.s8 %v1576
    %v1578 = vlaneseq
    %v1579 = vshrl.u32 %v1578, 7
    %v1580 = vsub.s32 %v1577, %v1579
    %v1581 = vrot.slane %v1567, %v1580
    %v1582 = vcombine.high %v1574, %v1574
    %v1583 = vcombine.high %v1581, %v1581
    %v1584 = vcombine.high %v907, %v907
    %v1586 = vunpack.c.l.s4 1983009808
    %v1587 = vunpack.c.0.s8 %v1586
    %v1588 = vlaneseq
    %v1589 = vshrl.u32 %v1588, 7
    %v1590 = vsub.s32 %v1587, %v1589
    %v1591 = vrot.slane %v907, %v1590
    %v1593 = vunpack.c.l.s4 1983009808
    %v1594 = vunpack.c.0.s8 %v1593
    %v1595 = vlaneseq
    %v1596 = vshrl.u32 %v1595, 7
    %v1597 = vsub.s32 %v1594, %v1596
    %v1598 = vrot.slane %v1584, %v1597
    %v1599 = vcombine.high %v1591, %v1591
    %v1600 = vcombine.high %v1598, %v1598
    %v1601 = vcombine.high %v908, %v908
    %v1603 = vunpack.c.l.s4 1983009808
    %v1604 = vunpack.c.0.s8 %v1603
    %v1605 = vlaneseq
    %v1606 = vshrl.u32 %v1605, 7
    %v1607 = vsub.s32 %v1604, %v1606
    %v1608 = vrot.slane %v908, %v1607
    %v1610 = vunpack.c.l.s4 1983009808
    %v1611 = vunpack.c.0.s8 %v1610
    %v1612 = vlaneseq
    %v1613 = vshrl.u32 %v1612, 7
    %v1614 = vsub.s32 %v1611, %v1613
    %v1615 = vrot.slane %v1601, %v1614
    %v1616 = vcombine.high %v1608, %v1608
    %v1617 = vcombine.high %v1615, %v1615
    %v1618 = vcombine.high %v909, %v909
    %v1620 = vunpack.c.l.s4 1983009808
    %v1621 = vunpack.c.0.s8 %v1620
    %v1622 = vlaneseq
    %v1623 = vshrl.u32 %v1622, 7
    %v1624 = vsub.s32 %v1621, %v1623
    %v1625 = vrot.slane %v909, %v1624
    %v1627 = vunpack.c.l.s4 1983009808
    %v1628 = vunpack.c.0.s8 %v1627
    %v1629 = vlaneseq
    %v1630 = vshrl.u32 %v1629, 7
    %v1631 = vsub.s32 %v1628, %v1630
    %v1632 = vrot.slane %v1618, %v1631
    %v1633 = vcombine.high %v1625, %v1625
    %v1634 = vcombine.high %v1632, %v1632
    %v1635 = vcombine.high %v910, %v910
    %v1637 = vunpack.c.l.s4 1983009808
    %v1638 = vunpack.c.0.s8 %v1637
    %v1639 = vlaneseq
    %v1640 = vshrl.u32 %v1639, 7
    %v1641 = vsub.s32 %v1638, %v1640
    %v1642 = vrot.slane %v910, %v1641
    %v1644 = vunpack.c.l.s4 1983009808
    %v1645 = vunpack.c.0.s8 %v1644
    %v1646 = vlaneseq
    %v1647 = vshrl.u32 %v1646, 7
    %v1648 = vsub.s32 %v1645, %v1647
    %v1649 = vrot.slane %v1635, %v1648
    %v1650 = vcombine.high %v1642, %v1642
    %v1651 = vcombine.high %v1649, %v1649
    %v1652 = vcombine.high %v911, %v911
    %v1654 = vunpack.c.l.s4 1983009808
    %v1655 = vunpack.c.0.s8 %v1654
    %v1656 = vlaneseq
    %v1657 = vshrl.u32 %v1656, 7
    %v1658 = vsub.s32 %v1655, %v1657
    %v1659 = vrot.slane %v911, %v1658
    %v1661 = vunpack.c.l.s4 1983009808
    %v1662 = vunpack.c.0.s8 %v1661
    %v1663 = vlaneseq
    %v1664 = vshrl.u32 %v1663, 7
    %v1665 = vsub.s32 %v1662, %v1664
    %v1666 = vrot.slane %v1652, %v1665
    %v1667 = vcombine.high %v1659, %v1659
    %v1668 = vcombine.high %v1666, %v1666
    %v1669 = vcombine.high %v912, %v912
    %v1671 = vunpack.c.l.s4 1983009808
    %v1672 = vunpack.c.0.s8 %v1671
    %v1673 = vlaneseq
    %v1674 = vshrl.u32 %v1673, 7
    %v1675 = vsub.s32 %v1672, %v1674
    %v1676 = vrot.slane %v912, %v1675
    %v1678 = vunpack.c.l.s4 1983009808
    %v1679 = vunpack.c.0.s8 %v1678
    %v1680 = vlaneseq
    %v1681 = vshrl.u32 %v1680, 7
    %v1682 = vsub.s32 %v1679, %v1681
    %v1683 = vrot.slane %v1669, %v1682
    %v1684 = vcombine.high %v1676, %v1676
    %v1685 = vcombine.high %v1683, %v1683
    %v1686 = vcombine.high %v913, %v913
    %v1688 = vunpack.c.l.s4 1983009808
    %v1689 = vunpack.c.0.s8 %v1688
    %v1690 = vlaneseq
    %v1691 = vshrl.u32 %v1690, 7
    %v1692 = vsub.s32 %v1689, %v1691
    %v1693 = vrot.slane %v913, %v1692
    %v1695 = vunpack.c.l.s4 1983009808
    %v1696 = vunpack.c.0.s8 %v1695
    %v1697 = vlaneseq
    %v1698 = vshrl.u32 %v1697, 7
    %v1699 = vsub.s32 %v1696, %v1698
    %v1700 = vrot.slane %v1686, %v1699
    %v1701 = vcombine.high %v1693, %v1693
    %v1702 = vcombine.high %v1700, %v1700
    %v1703 = vcombine.high %v914, %v914
    %v1705 = vunpack.c.l.s4 1983009808
    %v1706 = vunpack.c.0.s8 %v1705
    %v1707 = vlaneseq
    %v1708 = vshrl.u32 %v1707, 7
    %v1709 = vsub.s32 %v1706, %v1708
    %v1710 = vrot.slane %v914, %v1709
    %v1712 = vunpack.c.l.s4 1983009808
    %v1713 = vunpack.c.0.s8 %v1712
    %v1714 = vlaneseq
    %v1715 = vshrl.u32 %v1714, 7
    %v1716 = vsub.s32 %v1713, %v1715
    %v1717 = vrot.slane %v1703, %v1716
    %v1718 = vcombine.high %v1710, %v1710
    %v1719 = vcombine.high %v1717, %v1717
    %v1720 = vcombine.high %v915, %v915
    %v1722 = vunpack.c.l.s4 1983009808
    %v1723 = vunpack.c.0.s8 %v1722
    %v1724 = vlaneseq
    %v1725 = vshrl.u32 %v1724, 7
    %v1726 = vsub.s32 %v1723, %v1725
    %v1727 = vrot.slane %v915, %v1726
    %v1729 = vunpack.c.l.s4 1983009808
    %v1730 = vunpack.c.0.s8 %v1729
    %v1731 = vlaneseq
    %v1732 = vshrl.u32 %v1731, 7
    %v1733 = vsub.s32 %v1730, %v1732
    %v1734 = vrot.slane %v1720, %v1733
    %v1735 = vcombine.high %v1727, %v1727
    %v1736 = vcombine.high %v1734, %v1734
    %v1738 = vunpack.c.l.s4 1983009808
    %v1739 = vunpack.c.0.s8 %v1738
    %v1740 = vlaneseq
    %v1741 = vshrl.u32 %v1740, 7
    %v1742 = vsub.s32 %v1739, %v1741
    %v1743 = vrot.slane %v916, %v1742
    %v1926 = vmax.f32 %v971, %v997
    %v1927 = vmax.f32 %v979, %v1005
    %v1928 = vmax.f32 %v978, %v1013
    %v1929 = vmax.f32 %v980, %v1012
    %v1930 = vmax.f32 %v988, %v1014
    %v1931 = vmax.f32 %v996, %v1022
    %v1932 = vmax.f32 %v995, %v1030
    %v1933 = vmax.f32 %v1029, %v1064
    %v1934 = vmax.f32 %v1031, %v1063
    %v1935 = vmax.f32 %v1039, %v1065
    %v1936 = vmax.f32 %v1047, %v1073
    %v1937 = vmax.f32 %v1046, %v1081
    %v1938 = vmax.f32 %v1048, %v1080
    %v1939 = vmax.f32 %v1056, %v1082
    %v1940 = vmax.f32 %v1090, %v1116
    %v1941 = vmax.f32 %v1098, %v1124
    %v1942 = vmax.f32 %v1097, %v1132
    %v1943 = vmax.f32 %v1099, %v1131
    %v1944 = vmax.f32 %v1107, %v1133
    %v1945 = vmax.f32 %v1115, %v1141
    %v1946 = vmax.f32 %v1114, %v1149
    %v1947 = vmax.f32 %v1148, %v1183
    %v1948 = vmax.f32 %v1150, %v1182
    %v1949 = vmax.f32 %v1158, %v1184
    %v1950 = vmax.f32 %v1166, %v1192
    %v1951 = vmax.f32 %v1165, %v1200
    %v1952 = vmax.f32 %v1167, %v1199
    %v1953 = vmax.f32 %v1175, %v1201
    %v1954 = vmax.f32 %v1209, %v1235
    %v1955 = vmax.f32 %v1217, %v1243
    %v1956 = vmax.f32 %v1216, %v1251
    %v1957 = vmax.f32 %v1218, %v1250
    %v1958 = vmax.f32 %v1226, %v1252
    %v1959 = vmax.f32 %v1234, %v1260
    %v1960 = vmax.f32 %v1233, %v1268
    %v1961 = vmax.f32 %v1267, %v1302
    %v1962 = vmax.f32 %v1269, %v1301
    %v1963 = vmax.f32 %v1277, %v1303
    %v1964 = vmax.f32 %v1285, %v1311
    %v1965 = vmax.f32 %v1284, %v1319
    %v1966 = vmax.f32 %v1286, %v1318
    %v1967 = vmax.f32 %v1294, %v1320
    %v1968 = vmax.f32 %v1361, %v1395
    %v1969 = vmax.f32 %v1362, %v1394
    %v1970 = vmax.f32 %v1370, %v1396
    %v1971 = vmax.f32 %v1378, %v1404
    %v1972 = vmax.f32 %v1377, %v1412
    %v1973 = vmax.f32 %v1379, %v1411
    %v1974 = vmax.f32 %v1387, %v1413
    %v1975 = vmax.f32 %v1421, %v1447
    %v1976 = vmax.f32 %v1429, %v1455
    %v1977 = vmax.f32 %v1428, %v1463
    %v1978 = vmax.f32 %v1430, %v1462
    %v1979 = vmax.f32 %v1438, %v1464
    %v1980 = vmax.f32 %v1446, %v1472
    %v1981 = vmax.f32 %v1445, %v1480
    %v1982 = vmax.f32 %v1479, %v1514
    %v1983 = vmax.f32 %v1481, %v1513
    %v1984 = vmax.f32 %v1489, %v1515
    %v1985 = vmax.f32 %v1497, %v1523
    %v1986 = vmax.f32 %v1496, %v1531
    %v1987 = vmax.f32 %v1498, %v1530
    %v1988 = vmax.f32 %v1506, %v1532
    %v1989 = vmax.f32 %v1540, %v1566
    %v1990 = vmax.f32 %v1548, %v1574
    %v1991 = vmax.f32 %v1547, %v1582
    %v1992 = vmax.f32 %v1549, %v1581
    %v1993 = vmax.f32 %v1557, %v1583
    %v1994 = vmax.f32 %v1565, %v1591
    %v1995 = vmax.f32 %v1564, %v1599
    %v1996 = vmax.f32 %v1598, %v1633
    %v1997 = vmax.f32 %v1600, %v1632
    %v1998 = vmax.f32 %v1608, %v1634
    %v1999 = vmax.f32 %v1616, %v1642
    %v2000 = vmax.f32 %v1615, %v1650
    %v2001 = vmax.f32 %v1617, %v1649
    %v2002 = vmax.f32 %v1625, %v1651
    %v2003 = vmax.f32 %v1659, %v1685
    %v2004 = vmax.f32 %v1667, %v1693
    %v2005 = vmax.f32 %v1666, %v1701
    %v2006 = vmax.f32 %v1668, %v1700
    %v2007 = vmax.f32 %v1676, %v1702
    %v2008 = vmax.f32 %v1684, %v1710
    %v2009 = vmax.f32 %v1683, %v1718
    %v2010 = vmax.f32 %v1926, %v1029
    %v2011 = vmax.f32 %v1927, %v1031
    %v2012 = vmax.f32 %v1928, %v1039
    %v2013 = vmax.f32 %v1929, %v1047
    %v2014 = vmax.f32 %v1930, %v1046
    %v2015 = vmax.f32 %v1931, %v1048
    %v2016 = vmax.f32 %v1932, %v1056
    %v2017 = vmax.f32 %v1933, %v1090
    %v2018 = vmax.f32 %v1934, %v1098
    %v2019 = vmax.f32 %v1935, %v1097
    %v2020 = vmax.f32 %v1936, %v1099
    %v2021 = vmax.f32 %v1937, %v1107
    %v2022 = vmax.f32 %v1938, %v1115
    %v2023 = vmax.f32 %v1939, %v1114
    %v2024 = vmax.f32 %v1940, %v1148
    %v2025 = vmax.f32 %v1941, %v1150
    %v2026 = vmax.f32 %v1942, %v1158
    %v2027 = vmax.f32 %v1943, %v1166
    %v2028 = vmax.f32 %v1944, %v1165
    %v2029 = vmax.f32 %v1945, %v1167
    %v2030 = vmax.f32 %v1946, %v1175
    %v2031 = vmax.f32 %v1947, %v1209
    %v2032 = vmax.f32 %v1948, %v1217
    %v2033 = vmax.f32 %v1949, %v1216
    %v2034 = vmax.f32 %v1950, %v1218
    %v2035 = vmax.f32 %v1951, %v1226
    %v2036 = vmax.f32 %v1952, %v1234
    %v2037 = vmax.f32 %v1953, %v1233
    %v2038 = vmax.f32 %v1954, %v1267
    %v2039 = vmax.f32 %v1955, %v1269
    %v2040 = vmax.f32 %v1956, %v1277
    %v2041 = vmax.f32 %v1957, %v1285
    %v2042 = vmax.f32 %v1958, %v1284
    %v2043 = vmax.f32 %v1959, %v1286
    %v2044 = vmax.f32 %v1960, %v1294
    %v2045 = vmax.f32 %v1961, %v1328
    %v2046 = vmax.f32 %v1962, %v1336
    %v2047 = vmax.f32 %v1963, %v1335
    %v2048 = vmax.f32 %v1964, %v1337
    %v2049 = vmax.f32 %v1965, %v1345
    %v2050 = vmax.f32 %v1966, %v1353
    %v2051 = vmax.f32 %v1967, %v1352
    %v2052 = vmax.f32 %v1968, %v1421
    %v2053 = vmax.f32 %v1969, %v1429
    %v2054 = vmax.f32 %v1970, %v1428
    %v2055 = vmax.f32 %v1971, %v1430
    %v2056 = vmax.f32 %v1972, %v1438
    %v2057 = vmax.f32 %v1973, %v1446
    %v2058 = vmax.f32 %v1974, %v1445
    %v2059 = vmax.f32 %v1975, %v1479
    %v2060 = vmax.f32 %v1976, %v1481
    %v2061 = vmax.f32 %v1977, %v1489
    %v2062 = vmax.f32 %v1978, %v1497
    %v2063 = vmax.f32 %v1979, %v1496
    %v2064 = vmax.f32 %v1980, %v1498
    %v2065 = vmax.f32 %v1981, %v1506
    %v2066 = vmax.f32 %v1982, %v1540
    %v2067 = vmax.f32 %v1983, %v1548
    %v2068 = vmax.f32 %v1984, %v1547
    %v2069 = vmax.f32 %v1985, %v1549
    %v2070 = vmax.f32 %v1986, %v1557
    %v2071 = vmax.f32 %v1987, %v1565
    %v2072 = vmax.f32 %v1988, %v1564
    %v2073 = vmax.f32 %v1989, %v1598
    %v2074 = vmax.f32 %v1990, %v1600
    %v2075 = vmax.f32 %v1991, %v1608
    %v2076 = vmax.f32 %v1992, %v1616
    %v2077 = vmax.f32 %v1993, %v1615
    %v2078 = vmax.f32 %v1994, %v1617
    %v2079 = vmax.f32 %v1995, %v1625
    %v2080 = vmax.f32 %v1996, %v1659
    %v2081 = vmax.f32 %v1997, %v1667
    %v2082 = vmax.f32 %v1998, %v1666
    %v2083 = vmax.f32 %v1999, %v1668
    %v2084 = vmax.f32 %v2000, %v1676
    %v2085 = vmax.f32 %v2001, %v1684
    %v2086 = vmax.f32 %v2002, %v1683
    %v2087 = vmax.f32 %v2003, %v1717
    %v2088 = vmax.f32 %v2004, %v1719
    %v2089 = vmax.f32 %v2005, %v1727
    %v2090 = vmax.f32 %v2006, %v1735
    %v2091 = vmax.f32 %v2007, %v1734
    %v2092 = vmax.f32 %v2008, %v1736
    %v2093 = vmax.f32 %v2009, %v1743
    %vm2178 = vcmask 1040384
    %vm2179 = vcmask 1042434
    %vm2180 = vmor %vm2178, %vm2179
    %vm2181 = vcmask 1044484
    %vm2182 = vmor %vm2180, %vm2181
    %vm2183 = vcmask 1046534
    %vm2184 = vmor %vm2182, %vm2183
    %v2185 = vrot.slane %v2010, 7
    %v2186 = vrot.slane %v2185, 2
    %v2187 = vrot.slane %v2011, 7
    %v2188 = vsel %vm2184, %v2186, %v2187
    %v2189 = vrot.slane %v2187, 2
    %v2190 = vrot.slane %v2012, 7
    %v2191 = vsel %vm2184, %v2189, %v2190
    %v2192 = vrot.slane %v2190, 2
    %v2193 = vrot.slane %v2013, 7
    %v2194 = vsel %vm2184, %v2192, %v2193
    %v2195 = vrot.slane %v2193, 2
    %v2196 = vrot.slane %v2014, 7
    %v2197 = vsel %vm2184, %v2195, %v2196
    %v2198 = vrot.slane %v2196, 2
    %v2199 = vrot.slane %v2015, 7
    %v2200 = vsel %vm2184, %v2198, %v2199
    %v2201 = vrot.slane %v2199, 2
    %v2202 = vrot.slane %v2016, 7
    %v2203 = vsel %vm2184, %v2201, %v2202
    %v2204 = vrot.slane %v2017, 7
    %v2205 = vrot.slane %v2204, 2
    %v2206 = vrot.slane %v2018, 7
    %v2207 = vsel %vm2184, %v2205, %v2206
    %v2208 = vrot.slane %v2206, 2
    %v2209 = vrot.slane %v2019, 7
    %v2210 = vsel %vm2184, %v2208, %v2209
    %v2211 = vrot.slane %v2209, 2
    %v2212 = vrot.slane %v2020, 7
    %v2213 = vsel %vm2184, %v2211, %v2212
    %v2214 = vrot.slane %v2212, 2
    %v2215 = vrot.slane %v2021, 7
    %v2216 = vsel %vm2184, %v2214, %v2215
    %v2217 = vrot.slane %v2215, 2
    %v2218 = vrot.slane %v2022, 7
    %v2219 = vsel %vm2184, %v2217, %v2218
    %v2220 = vrot.slane %v2218, 2
    %v2221 = vrot.slane %v2023, 7
    %v2222 = vsel %vm2184, %v2220, %v2221
    %v2223 = vrot.slane %v2024, 7
    %v2224 = vrot.slane %v2223, 2
    %v2225 = vrot.slane %v2025, 7
    %v2226 = vsel %vm2184, %v2224, %v2225
    %v2227 = vrot.slane %v2225, 2
    %v2228 = vrot.slane %v2026, 7
    %v2229 = vsel %vm2184, %v2227, %v2228
    %v2230 = vrot.slane %v2228, 2
    %v2231 = vrot.slane %v2027, 7
    %v2232 = vsel %vm2184, %v2230, %v2231
    %v2233 = vrot.slane %v2231, 2
    %v2234 = vrot.slane %v2028, 7
    %v2235 = vsel %vm2184, %v2233, %v2234
    %v2236 = vrot.slane %v2234, 2
    %v2237 = vrot.slane %v2029, 7
    %v2238 = vsel %vm2184, %v2236, %v2237
    %v2239 = vrot.slane %v2237, 2
    %v2240 = vrot.slane %v2030, 7
    %v2241 = vsel %vm2184, %v2239, %v2240
    %v2242 = vrot.slane %v2031, 7
    %v2243 = vrot.slane %v2242, 2
    %v2244 = vrot.slane %v2032, 7
    %v2245 = vsel %vm2184, %v2243, %v2244
    %v2246 = vrot.slane %v2244, 2
    %v2247 = vrot.slane %v2033, 7
    %v2248 = vsel %vm2184, %v2246, %v2247
    %v2249 = vrot.slane %v2247, 2
    %v2250 = vrot.slane %v2034, 7
    %v2251 = vsel %vm2184, %v2249, %v2250
    %v2252 = vrot.slane %v2250, 2
    %v2253 = vrot.slane %v2035, 7
    %v2254 = vsel %vm2184, %v2252, %v2253
    %v2255 = vrot.slane %v2253, 2
    %v2256 = vrot.slane %v2036, 7
    %v2257 = vsel %vm2184, %v2255, %v2256
    %v2258 = vrot.slane %v2256, 2
    %v2259 = vrot.slane %v2037, 7
    %v2260 = vsel %vm2184, %v2258, %v2259
    %v2261 = vrot.slane %v2038, 7
    %v2262 = vrot.slane %v2261, 2
    %v2263 = vrot.slane %v2039, 7
    %v2264 = vsel %vm2184, %v2262, %v2263
    %v2265 = vrot.slane %v2263, 2
    %v2266 = vrot.slane %v2040, 7
    %v2267 = vsel %vm2184, %v2265, %v2266
    %v2268 = vrot.slane %v2266, 2
    %v2269 = vrot.slane %v2041, 7
    %v2270 = vsel %vm2184, %v2268, %v2269
    %v2271 = vrot.slane %v2269, 2
    %v2272 = vrot.slane %v2042, 7
    %v2273 = vsel %vm2184, %v2271, %v2272
    %v2274 = vrot.slane %v2272, 2
    %v2275 = vrot.slane %v2043, 7
    %v2276 = vsel %vm2184, %v2274, %v2275
    %v2277 = vrot.slane %v2275, 2
    %v2278 = vrot.slane %v2044, 7
    %v2279 = vsel %vm2184, %v2277, %v2278
    %v2280 = vrot.slane %v2045, 7
    %v2281 = vrot.slane %v2280, 2
    %v2282 = vrot.slane %v2046, 7
    %v2283 = vsel %vm2184, %v2281, %v2282
    %v2284 = vrot.slane %v2282, 2
    %v2285 = vrot.slane %v2047, 7
    %v2286 = vsel %vm2184, %v2284, %v2285
    %v2287 = vrot.slane %v2285, 2
    %v2288 = vrot.slane %v2048, 7
    %v2289 = vsel %vm2184, %v2287, %v2288
    %v2290 = vrot.slane %v2288, 2
    %v2291 = vrot.slane %v2049, 7
    %v2292 = vsel %vm2184, %v2290, %v2291
    %v2293 = vrot.slane %v2291, 2
    %v2294 = vrot.slane %v2050, 7
    %v2295 = vsel %vm2184, %v2293, %v2294
    %v2296 = vrot.slane %v2294, 2
    %v2297 = vrot.slane %v2051, 7
    %v2298 = vsel %vm2184, %v2296, %v2297
    %v2299 = vrot.slane %v2052, 7
    %v2300 = vrot.slane %v2299, 2
    %v2301 = vrot.slane %v2053, 7
    %v2302 = vsel %vm2184, %v2300, %v2301
    %v2303 = vrot.slane %v2301, 2
    %v2304 = vrot.slane %v2054, 7
    %v2305 = vsel %vm2184, %v2303, %v2304
    %v2306 = vrot.slane %v2304, 2
    %v2307 = vrot.slane %v2055, 7
    %v2308 = vsel %vm2184, %v2306, %v2307
    %v2309 = vrot.slane %v2307, 2
    %v2310 = vrot.slane %v2056, 7
    %v2311 = vsel %vm2184, %v2309, %v2310
    %v2312 = vrot.slane %v2310, 2
    %v2313 = vrot.slane %v2057, 7
    %v2314 = vsel %vm2184, %v2312, %v2313
    %v2315 = vrot.slane %v2313, 2
    %v2316 = vrot.slane %v2058, 7
    %v2317 = vsel %vm2184, %v2315, %v2316
    %v2318 = vrot.slane %v2059, 7
    %v2319 = vrot.slane %v2318, 2
    %v2320 = vrot.slane %v2060, 7
    %v2321 = vsel %vm2184, %v2319, %v2320
    %v2322 = vrot.slane %v2320, 2
    %v2323 = vrot.slane %v2061, 7
    %v2324 = vsel %vm2184, %v2322, %v2323
    %v2325 = vrot.slane %v2323, 2
    %v2326 = vrot.slane %v2062, 7
    %v2327 = vsel %vm2184, %v2325, %v2326
    %v2328 = vrot.slane %v2326, 2
    %v2329 = vrot.slane %v2063, 7
    %v2330 = vsel %vm2184, %v2328, %v2329
    %v2331 = vrot.slane %v2329, 2
    %v2332 = vrot.slane %v2064, 7
    %v2333 = vsel %vm2184, %v2331, %v2332
    %v2334 = vrot.slane %v2332, 2
    %v2335 = vrot.slane %v2065, 7
    %v2336 = vsel %vm2184, %v2334, %v2335
    %v2337 = vrot.slane %v2066, 7
    %v2338 = vrot.slane %v2337, 2
    %v2339 = vrot.slane %v2067, 7
    %v2340 = vsel %vm2184, %v2338, %v2339
    %v2341 = vrot.slane %v2339, 2
    %v2342 = vrot.slane %v2068, 7
    %v2343 = vsel %vm2184, %v2341, %v2342
    %v2344 = vrot.slane %v2342, 2
    %v2345 = vrot.slane %v2069, 7
    %v2346 = vsel %vm2184, %v2344, %v2345
    %v2347 = vrot.slane %v2345, 2
    %v2348 = vrot.slane %v2070, 7
    %v2349 = vsel %vm2184, %v2347, %v2348
    %v2350 = vrot.slane %v2348, 2
    %v2351 = vrot.slane %v2071, 7
    %v2352 = vsel %vm2184, %v2350, %v2351
    %v2353 = vrot.slane %v2351, 2
    %v2354 = vrot.slane %v2072, 7
    %v2355 = vsel %vm2184, %v2353, %v2354
    %v2356 = vrot.slane %v2073, 7
    %v2357 = vrot.slane %v2356, 2
    %v2358 = vrot.slane %v2074, 7
    %v2359 = vsel %vm2184, %v2357, %v2358
    %v2360 = vrot.slane %v2358, 2
    %v2361 = vrot.slane %v2075, 7
    %v2362 = vsel %vm2184, %v2360, %v2361
    %v2363 = vrot.slane %v2361, 2
    %v2364 = vrot.slane %v2076, 7
    %v2365 = vsel %vm2184, %v2363, %v2364
    %v2366 = vrot.slane %v2364, 2
    %v2367 = vrot.slane %v2077, 7
    %v2368 = vsel %vm2184, %v2366, %v2367
    %v2369 = vrot.slane %v2367, 2
    %v2370 = vrot.slane %v2078, 7
    %v2371 = vsel %vm2184, %v2369, %v2370
    %v2372 = vrot.slane %v2370, 2
    %v2373 = vrot.slane %v2079, 7
    %v2374 = vsel %vm2184, %v2372, %v2373
    %v2375 = vrot.slane %v2080, 7
    %v2376 = vrot.slane %v2375, 2
    %v2377 = vrot.slane %v2081, 7
    %v2378 = vsel %vm2184, %v2376, %v2377
    %v2379 = vrot.slane %v2377, 2
    %v2380 = vrot.slane %v2082, 7
    %v2381 = vsel %vm2184, %v2379, %v2380
    %v2382 = vrot.slane %v2380, 2
    %v2383 = vrot.slane %v2083, 7
    %v2384 = vsel %vm2184, %v2382, %v2383
    %v2385 = vrot.slane %v2383, 2
    %v2386 = vrot.slane %v2084, 7
    %v2387 = vsel %vm2184, %v2385, %v2386
    %v2388 = vrot.slane %v2386, 2
    %v2389 = vrot.slane %v2085, 7
    %v2390 = vsel %vm2184, %v2388, %v2389
    %v2391 = vrot.slane %v2389, 2
    %v2392 = vrot.slane %v2086, 7
    %v2393 = vsel %vm2184, %v2391, %v2392
    %v2394 = vrot.slane %v2087, 7
    %v2395 = vrot.slane %v2394, 2
    %v2396 = vrot.slane %v2088, 7
    %v2397 = vsel %vm2184, %v2395, %v2396
    %v2398 = vrot.slane %v2396, 2
    %v2399 = vrot.slane %v2089, 7
    %v2400 = vsel %vm2184, %v2398, %v2399
    %v2401 = vrot.slane %v2399, 2
    %v2402 = vrot.slane %v2090, 7
    %v2403 = vsel %vm2184, %v2401, %v2402
    %v2404 = vrot.slane %v2402, 2
    %v2405 = vrot.slane %v2091, 7
    %v2406 = vsel %vm2184, %v2404, %v2405
    %v2407 = vrot.slane %v2405, 2
    %v2408 = vrot.slane %v2092, 7
    %v2409 = vsel %vm2184, %v2407, %v2408
    %v2410 = vrot.slane %v2408, 2
    %v2411 = vrot.slane %v2093, 7
    %v2412 = vsel %vm2184, %v2410, %v2411
    %v2485 = vmax.f32 %v2010, %v2186
    %v2486 = vmax.f32 %v2011, %v2189
    %v2487 = vmax.f32 %v2012, %v2192
    %v2488 = vmax.f32 %v2013, %v2195
    %v2489 = vmax.f32 %v2014, %v2198
    %v2490 = vmax.f32 %v2015, %v2201
    %v2491 = vmax.f32 %v2017, %v2205
    %v2492 = vmax.f32 %v2018, %v2208
    %v2493 = vmax.f32 %v2019, %v2211
    %v2494 = vmax.f32 %v2020, %v2214
    %v2495 = vmax.f32 %v2021, %v2217
    %v2496 = vmax.f32 %v2022, %v2220
    %v2497 = vmax.f32 %v2024, %v2224
    %v2498 = vmax.f32 %v2025, %v2227
    %v2499 = vmax.f32 %v2026, %v2230
    %v2500 = vmax.f32 %v2027, %v2233
    %v2501 = vmax.f32 %v2028, %v2236
    %v2502 = vmax.f32 %v2029, %v2239
    %v2503 = vmax.f32 %v2031, %v2243
    %v2504 = vmax.f32 %v2032, %v2246
    %v2505 = vmax.f32 %v2033, %v2249
    %v2506 = vmax.f32 %v2034, %v2252
    %v2507 = vmax.f32 %v2035, %v2255
    %v2508 = vmax.f32 %v2036, %v2258
    %v2509 = vmax.f32 %v2038, %v2262
    %v2510 = vmax.f32 %v2039, %v2265
    %v2511 = vmax.f32 %v2040, %v2268
    %v2512 = vmax.f32 %v2041, %v2271
    %v2513 = vmax.f32 %v2042, %v2274
    %v2514 = vmax.f32 %v2043, %v2277
    %v2515 = vmax.f32 %v2045, %v2281
    %v2516 = vmax.f32 %v2046, %v2284
    %v2517 = vmax.f32 %v2047, %v2287
    %v2518 = vmax.f32 %v2048, %v2290
    %v2519 = vmax.f32 %v2049, %v2293
    %v2520 = vmax.f32 %v2050, %v2296
    %v2521 = vmax.f32 %v2052, %v2300
    %v2522 = vmax.f32 %v2053, %v2303
    %v2523 = vmax.f32 %v2054, %v2306
    %v2524 = vmax.f32 %v2055, %v2309
    %v2525 = vmax.f32 %v2056, %v2312
    %v2526 = vmax.f32 %v2057, %v2315
    %v2527 = vmax.f32 %v2059, %v2319
    %v2528 = vmax.f32 %v2060, %v2322
    %v2529 = vmax.f32 %v2061, %v2325
    %v2530 = vmax.f32 %v2062, %v2328
    %v2531 = vmax.f32 %v2063, %v2331
    %v2532 = vmax.f32 %v2064, %v2334
    %v2533 = vmax.f32 %v2066, %v2338
    %v2534 = vmax.f32 %v2067, %v2341
    %v2535 = vmax.f32 %v2068, %v2344
    %v2536 = vmax.f32 %v2069, %v2347
    %v2537 = vmax.f32 %v2070, %v2350
    %v2538 = vmax.f32 %v2071, %v2353
    %v2539 = vmax.f32 %v2073, %v2357
    %v2540 = vmax.f32 %v2074, %v2360
    %v2541 = vmax.f32 %v2075, %v2363
    %v2542 = vmax.f32 %v2076, %v2366
    %v2543 = vmax.f32 %v2077, %v2369
    %v2544 = vmax.f32 %v2078, %v2372
    %v2545 = vmax.f32 %v2080, %v2376
    %v2546 = vmax.f32 %v2081, %v2379
    %v2547 = vmax.f32 %v2082, %v2382
    %v2548 = vmax.f32 %v2083, %v2385
    %v2549 = vmax.f32 %v2084, %v2388
    %v2550 = vmax.f32 %v2085, %v2391
    %v2551 = vmax.f32 %v2087, %v2395
    %v2552 = vmax.f32 %v2088, %v2398
    %v2553 = vmax.f32 %v2089, %v2401
    %v2554 = vmax.f32 %v2090, %v2404
    %v2555 = vmax.f32 %v2091, %v2407
    %v2556 = vmax.f32 %v2092, %v2410
    %v2557 = vrot.slane %v2188, 7
    %v2558 = vrot.slane %v2557, 2
    %v2559 = vrot.slane %v2191, 7
    %v2560 = vrot.slane %v2559, 2
    %v2561 = vrot.slane %v2194, 7
    %v2562 = vrot.slane %v2561, 2
    %v2563 = vrot.slane %v2197, 7
    %v2564 = vrot.slane %v2563, 2
    %v2565 = vrot.slane %v2200, 7
    %v2566 = vrot.slane %v2565, 2
    %v2567 = vrot.slane %v2203, 7
    %v2568 = vrot.slane %v2567, 2
    %v2569 = vrot.slane %v2207, 7
    %v2570 = vrot.slane %v2569, 2
    %v2571 = vrot.slane %v2210, 7
    %v2572 = vrot.slane %v2571, 2
    %v2573 = vrot.slane %v2213, 7
    %v2574 = vrot.slane %v2573, 2
    %v2575 = vrot.slane %v2216, 7
    %v2576 = vrot.slane %v2575, 2
    %v2577 = vrot.slane %v2219, 7
    %v2578 = vrot.slane %v2577, 2
    %v2579 = vrot.slane %v2222, 7
    %v2580 = vrot.slane %v2579, 2
    %v2581 = vrot.slane %v2226, 7
    %v2582 = vrot.slane %v2581, 2
    %v2583 = vrot.slane %v2229, 7
    %v2584 = vrot.slane %v2583, 2
    %v2585 = vrot.slane %v2232, 7
    %v2586 = vrot.slane %v2585, 2
    %v2587 = vrot.slane %v2235, 7
    %v2588 = vrot.slane %v2587, 2
    %v2589 = vrot.slane %v2238, 7
    %v2590 = vrot.slane %v2589, 2
    %v2591 = vrot.slane %v2241, 7
    %v2592 = vrot.slane %v2591, 2
    %v2593 = vrot.slane %v2245, 7
    %v2594 = vrot.slane %v2593, 2
    %v2595 = vrot.slane %v2248, 7
    %v2596 = vrot.slane %v2595, 2
    %v2597 = vrot.slane %v2251, 7
    %v2598 = vrot.slane %v2597, 2
    %v2599 = vrot.slane %v2254, 7
    %v2600 = vrot.slane %v2599, 2
    %v2601 = vrot.slane %v2257, 7
    %v2602 = vrot.slane %v2601, 2
    %v2603 = vrot.slane %v2260, 7
    %v2604 = vrot.slane %v2603, 2
    %v2605 = vrot.slane %v2264, 7
    %v2606 = vrot.slane %v2605, 2
    %v2607 = vrot.slane %v2267, 7
    %v2608 = vrot.slane %v2607, 2
    %v2609 = vrot.slane %v2270, 7
    %v2610 = vrot.slane %v2609, 2
    %v2611 = vrot.slane %v2273, 7
    %v2612 = vrot.slane %v2611, 2
    %v2613 = vrot.slane %v2276, 7
    %v2614 = vrot.slane %v2613, 2
    %v2615 = vrot.slane %v2279, 7
    %v2616 = vrot.slane %v2615, 2
    %v2617 = vrot.slane %v2283, 7
    %v2618 = vrot.slane %v2617, 2
    %v2619 = vrot.slane %v2286, 7
    %v2620 = vrot.slane %v2619, 2
    %v2621 = vrot.slane %v2289, 7
    %v2622 = vrot.slane %v2621, 2
    %v2623 = vrot.slane %v2292, 7
    %v2624 = vrot.slane %v2623, 2
    %v2625 = vrot.slane %v2295, 7
    %v2626 = vrot.slane %v2625, 2
    %v2627 = vrot.slane %v2298, 7
    %v2628 = vrot.slane %v2627, 2
    %v2629 = vrot.slane %v2302, 7
    %v2630 = vrot.slane %v2629, 2
    %v2631 = vrot.slane %v2305, 7
    %v2632 = vrot.slane %v2631, 2
    %v2633 = vrot.slane %v2308, 7
    %v2634 = vrot.slane %v2633, 2
    %v2635 = vrot.slane %v2311, 7
    %v2636 = vrot.slane %v2635, 2
    %v2637 = vrot.slane %v2314, 7
    %v2638 = vrot.slane %v2637, 2
    %v2639 = vrot.slane %v2317, 7
    %v2640 = vrot.slane %v2639, 2
    %v2641 = vrot.slane %v2321, 7
    %v2642 = vrot.slane %v2641, 2
    %v2643 = vrot.slane %v2324, 7
    %v2644 = vrot.slane %v2643, 2
    %v2645 = vrot.slane %v2327, 7
    %v2646 = vrot.slane %v2645, 2
    %v2647 = vrot.slane %v2330, 7
    %v2648 = vrot.slane %v2647, 2
    %v2649 = vrot.slane %v2333, 7
    %v2650 = vrot.slane %v2649, 2
    %v2651 = vrot.slane %v2336, 7
    %v2652 = vrot.slane %v2651, 2
    %v2653 = vrot.slane %v2340, 7
    %v2654 = vrot.slane %v2653, 2
    %v2655 = vrot.slane %v2343, 7
    %v2656 = vrot.slane %v2655, 2
    %v2657 = vrot.slane %v2346, 7
    %v2658 = vrot.slane %v2657, 2
    %v2659 = vrot.slane %v2349, 7
    %v2660 = vrot.slane %v2659, 2
    %v2661 = vrot.slane %v2352, 7
    %v2662 = vrot.slane %v2661, 2
    %v2663 = vrot.slane %v2355, 7
    %v2664 = vrot.slane %v2663, 2
    %v2665 = vrot.slane %v2359, 7
    %v2666 = vrot.slane %v2665, 2
    %v2667 = vrot.slane %v2362, 7
    %v2668 = vrot.slane %v2667, 2
    %v2669 = vrot.slane %v2365, 7
    %v2670 = vrot.slane %v2669, 2
    %v2671 = vrot.slane %v2368, 7
    %v2672 = vrot.slane %v2671, 2
    %v2673 = vrot.slane %v2371, 7
    %v2674 = vrot.slane %v2673, 2
    %v2675 = vrot.slane %v2374, 7
    %v2676 = vrot.slane %v2675, 2
    %v2677 = vrot.slane %v2378, 7
    %v2678 = vrot.slane %v2677, 2
    %v2679 = vrot.slane %v2381, 7
    %v2680 = vrot.slane %v2679, 2
    %v2681 = vrot.slane %v2384, 7
    %v2682 = vrot.slane %v2681, 2
    %v2683 = vrot.slane %v2387, 7
    %v2684 = vrot.slane %v2683, 2
    %v2685 = vrot.slane %v2390, 7
    %v2686 = vrot.slane %v2685, 2
    %v2687 = vrot.slane %v2393, 7
    %v2688 = vrot.slane %v2687, 2
    %v2689 = vrot.slane %v2397, 7
    %v2690 = vrot.slane %v2689, 2
    %v2691 = vrot.slane %v2400, 7
    %v2692 = vrot.slane %v2691, 2
    %v2693 = vrot.slane %v2403, 7
    %v2694 = vrot.slane %v2693, 2
    %v2695 = vrot.slane %v2406, 7
    %v2696 = vrot.slane %v2695, 2
    %v2697 = vrot.slane %v2409, 7
    %v2698 = vrot.slane %v2697, 2
    %v2699 = vrot.slane %v2412, 7
    %v2700 = vrot.slane %v2699, 2
    %v2773 = vmax.f32 %v2485, %v2558
    %v2774 = vmax.f32 %v2486, %v2560
    %v2775 = vmax.f32 %v2487, %v2562
    %v2776 = vmax.f32 %v2488, %v2564
    %v2777 = vmax.f32 %v2489, %v2566
    %v2778 = vmax.f32 %v2490, %v2568
    %v2779 = vmax.f32 %v2491, %v2570
    %v2780 = vmax.f32 %v2492, %v2572
    %v2781 = vmax.f32 %v2493, %v2574
    %v2782 = vmax.f32 %v2494, %v2576
    %v2783 = vmax.f32 %v2495, %v2578
    %v2784 = vmax.f32 %v2496, %v2580
    %v2785 = vmax.f32 %v2497, %v2582
    %v2786 = vmax.f32 %v2498, %v2584
    %v2787 = vmax.f32 %v2499, %v2586
    %v2788 = vmax.f32 %v2500, %v2588
    %v2789 = vmax.f32 %v2501, %v2590
    %v2790 = vmax.f32 %v2502, %v2592
    %v2791 = vmax.f32 %v2503, %v2594
    %v2792 = vmax.f32 %v2504, %v2596
    %v2793 = vmax.f32 %v2505, %v2598
    %v2794 = vmax.f32 %v2506, %v2600
    %v2795 = vmax.f32 %v2507, %v2602
    %v2796 = vmax.f32 %v2508, %v2604
    %v2797 = vmax.f32 %v2509, %v2606
    %v2798 = vmax.f32 %v2510, %v2608
    %v2799 = vmax.f32 %v2511, %v2610
    %v2800 = vmax.f32 %v2512, %v2612
    %v2801 = vmax.f32 %v2513, %v2614
    %v2802 = vmax.f32 %v2514, %v2616
    %v2803 = vmax.f32 %v2515, %v2618
    %v2804 = vmax.f32 %v2516, %v2620
    %v2805 = vmax.f32 %v2517, %v2622
    %v2806 = vmax.f32 %v2518, %v2624
    %v2807 = vmax.f32 %v2519, %v2626
    %v2808 = vmax.f32 %v2520, %v2628
    %v2809 = vmax.f32 %v2521, %v2630
    %v2810 = vmax.f32 %v2522, %v2632
    %v2811 = vmax.f32 %v2523, %v2634
    %v2812 = vmax.f32 %v2524, %v2636
    %v2813 = vmax.f32 %v2525, %v2638
    %v2814 = vmax.f32 %v2526, %v2640
    %v2815 = vmax.f32 %v2527, %v2642
    %v2816 = vmax.f32 %v2528, %v2644
    %v2817 = vmax.f32 %v2529, %v2646
    %v2818 = vmax.f32 %v2530, %v2648
    %v2819 = vmax.f32 %v2531, %v2650
    %v2820 = vmax.f32 %v2532, %v2652
    %v2821 = vmax.f32 %v2533, %v2654
    %v2822 = vmax.f32 %v2534, %v2656
    %v2823 = vmax.f32 %v2535, %v2658
    %v2824 = vmax.f32 %v2536, %v2660
    %v2825 = vmax.f32 %v2537, %v2662
    %v2826 = vmax.f32 %v2538, %v2664
    %v2827 = vmax.f32 %v2539, %v2666
    %v2828 = vmax.f32 %v2540, %v2668
    %v2829 = vmax.f32 %v2541, %v2670
    %v2830 = vmax.f32 %v2542, %v2672
    %v2831 = vmax.f32 %v2543, %v2674
    %v2832 = vmax.f32 %v2544, %v2676
    %v2833 = vmax.f32 %v2545, %v2678
    %v2834 = vmax.f32 %v2546, %v2680
    %v2835 = vmax.f32 %v2547, %v2682
    %v2836 = vmax.f32 %v2548, %v2684
    %v2837 = vmax.f32 %v2549, %v2686
    %v2838 = vmax.f32 %v2550, %v2688
    %v2839 = vmax.f32 %v2551, %v2690
    %v2840 = vmax.f32 %v2552, %v2692
    %v2841 = vmax.f32 %v2553, %v2694
    %v2842 = vmax.f32 %v2554, %v2696
    %v2843 = vmax.f32 %v2555, %v2698
    %v2844 = vmax.f32 %v2556, %v2700
    %v2917 = vlaneseq
    %v2918 = vshrl.u32 %v2917, 7
    %v2919 = vsub.s32 0, %v2918
    %v2920 = vrot.slane %v2773, %v2919
    %v2921 = vlaneseq
    %v2922 = vshrl.u32 %v2921, 7
    %v2923 = vsub.s32 0, %v2922
    %v2924 = vrot.slane %v2774, %v2923
    %v2925 = vlaneseq
    %v2926 = vshrl.u32 %v2925, 7
    %v2927 = vsub.s32 0, %v2926
    %v2928 = vrot.slane %v2775, %v2927
    %v2929 = vlaneseq
    %v2930 = vshrl.u32 %v2929, 7
    %v2931 = vsub.s32 0, %v2930
    %v2932 = vrot.slane %v2776, %v2931
    %v2933 = vlaneseq
    %v2934 = vshrl.u32 %v2933, 7
    %v2935 = vsub.s32 0, %v2934
    %v2936 = vrot.slane %v2777, %v2935
    %v2937 = vlaneseq
    %v2938 = vshrl.u32 %v2937, 7
    %v2939 = vsub.s32 0, %v2938
    %v2940 = vrot.slane %v2778, %v2939
    %v2941 = vlaneseq
    %v2942 = vshrl.u32 %v2941, 7
    %v2943 = vsub.s32 0, %v2942
    %v2944 = vrot.slane %v2779, %v2943
    %v2945 = vlaneseq
    %v2946 = vshrl.u32 %v2945, 7
    %v2947 = vsub.s32 0, %v2946
    %v2948 = vrot.slane %v2780, %v2947
    %v2949 = vlaneseq
    %v2950 = vshrl.u32 %v2949, 7
    %v2951 = vsub.s32 0, %v2950
    %v2952 = vrot.slane %v2781, %v2951
    %v2953 = vlaneseq
    %v2954 = vshrl.u32 %v2953, 7
    %v2955 = vsub.s32 0, %v2954
    %v2956 = vrot.slane %v2782, %v2955
    %v2957 = vlaneseq
    %v2958 = vshrl.u32 %v2957, 7
    %v2959 = vsub.s32 0, %v2958
    %v2960 = vrot.slane %v2783, %v2959
    %v2961 = vlaneseq
    %v2962 = vshrl.u32 %v2961, 7
    %v2963 = vsub.s32 0, %v2962
    %v2964 = vrot.slane %v2784, %v2963
    %v2965 = vlaneseq
    %v2966 = vshrl.u32 %v2965, 7
    %v2967 = vsub.s32 0, %v2966
    %v2968 = vrot.slane %v2785, %v2967
    %v2969 = vlaneseq
    %v2970 = vshrl.u32 %v2969, 7
    %v2971 = vsub.s32 0, %v2970
    %v2972 = vrot.slane %v2786, %v2971
    %v2973 = vlaneseq
    %v2974 = vshrl.u32 %v2973, 7
    %v2975 = vsub.s32 0, %v2974
    %v2976 = vrot.slane %v2787, %v2975
    %v2977 = vlaneseq
    %v2978 = vshrl.u32 %v2977, 7
    %v2979 = vsub.s32 0, %v2978
    %v2980 = vrot.slane %v2788, %v2979
    %v2981 = vlaneseq
    %v2982 = vshrl.u32 %v2981, 7
    %v2983 = vsub.s32 0, %v2982
    %v2984 = vrot.slane %v2789, %v2983
    %v2985 = vlaneseq
    %v2986 = vshrl.u32 %v2985, 7
    %v2987 = vsub.s32 0, %v2986
    %v2988 = vrot.slane %v2790, %v2987
    %v2989 = vlaneseq
    %v2990 = vshrl.u32 %v2989, 7
    %v2991 = vsub.s32 0, %v2990
    %v2992 = vrot.slane %v2791, %v2991
    %v2993 = vlaneseq
    %v2994 = vshrl.u32 %v2993, 7
    %v2995 = vsub.s32 0, %v2994
    %v2996 = vrot.slane %v2792, %v2995
    %v2997 = vlaneseq
    %v2998 = vshrl.u32 %v2997, 7
    %v2999 = vsub.s32 0, %v2998
    %v3000 = vrot.slane %v2793, %v2999
    %v3001 = vlaneseq
    %v3002 = vshrl.u32 %v3001, 7
    %v3003 = vsub.s32 0, %v3002
    %v3004 = vrot.slane %v2794, %v3003
    %v3005 = vlaneseq
    %v3006 = vshrl.u32 %v3005, 7
    %v3007 = vsub.s32 0, %v3006
    %v3008 = vrot.slane %v2795, %v3007
    %v3009 = vlaneseq
    %v3010 = vshrl.u32 %v3009, 7
    %v3011 = vsub.s32 0, %v3010
    %v3012 = vrot.slane %v2796, %v3011
    %v3013 = vlaneseq
    %v3014 = vshrl.u32 %v3013, 7
    %v3015 = vsub.s32 0, %v3014
    %v3016 = vrot.slane %v2797, %v3015
    %v3017 = vlaneseq
    %v3018 = vshrl.u32 %v3017, 7
    %v3019 = vsub.s32 0, %v3018
    %v3020 = vrot.slane %v2798, %v3019
    %v3021 = vlaneseq
    %v3022 = vshrl.u32 %v3021, 7
    %v3023 = vsub.s32 0, %v3022
    %v3024 = vrot.slane %v2799, %v3023
    %v3025 = vlaneseq
    %v3026 = vshrl.u32 %v3025, 7
    %v3027 = vsub.s32 0, %v3026
    %v3028 = vrot.slane %v2800, %v3027
    %v3029 = vlaneseq
    %v3030 = vshrl.u32 %v3029, 7
    %v3031 = vsub.s32 0, %v3030
    %v3032 = vrot.slane %v2801, %v3031
    %v3033 = vlaneseq
    %v3034 = vshrl.u32 %v3033, 7
    %v3035 = vsub.s32 0, %v3034
    %v3036 = vrot.slane %v2802, %v3035
    %v3037 = vlaneseq
    %v3038 = vshrl.u32 %v3037, 7
    %v3039 = vsub.s32 0, %v3038
    %v3040 = vrot.slane %v2803, %v3039
    %v3041 = vlaneseq
    %v3042 = vshrl.u32 %v3041, 7
    %v3043 = vsub.s32 0, %v3042
    %v3044 = vrot.slane %v2804, %v3043
    %v3045 = vlaneseq
    %v3046 = vshrl.u32 %v3045, 7
    %v3047 = vsub.s32 0, %v3046
    %v3048 = vrot.slane %v2805, %v3047
    %v3049 = vlaneseq
    %v3050 = vshrl.u32 %v3049, 7
    %v3051 = vsub.s32 0, %v3050
    %v3052 = vrot.slane %v2806, %v3051
    %v3053 = vlaneseq
    %v3054 = vshrl.u32 %v3053, 7
    %v3055 = vsub.s32 0, %v3054
    %v3056 = vrot.slane %v2807, %v3055
    %v3057 = vlaneseq
    %v3058 = vshrl.u32 %v3057, 7
    %v3059 = vsub.s32 0, %v3058
    %v3060 = vrot.slane %v2808, %v3059
    %v3061 = vlaneseq
    %v3062 = vshrl.u32 %v3061, 7
    %v3063 = vsub.s32 0, %v3062
    %v3064 = vrot.slane %v2809, %v3063
    %v3065 = vlaneseq
    %v3066 = vshrl.u32 %v3065, 7
    %v3067 = vsub.s32 0, %v3066
    %v3068 = vrot.slane %v2810, %v3067
    %v3069 = vlaneseq
    %v3070 = vshrl.u32 %v3069, 7
    %v3071 = vsub.s32 0, %v3070
    %v3072 = vrot.slane %v2811, %v3071
    %v3073 = vlaneseq
    %v3074 = vshrl.u32 %v3073, 7
    %v3075 = vsub.s32 0, %v3074
    %v3076 = vrot.slane %v2812, %v3075
    %v3077 = vlaneseq
    %v3078 = vshrl.u32 %v3077, 7
    %v3079 = vsub.s32 0, %v3078
    %v3080 = vrot.slane %v2813, %v3079
    %v3081 = vlaneseq
    %v3082 = vshrl.u32 %v3081, 7
    %v3083 = vsub.s32 0, %v3082
    %v3084 = vrot.slane %v2814, %v3083
    %v3085 = vlaneseq
    %v3086 = vshrl.u32 %v3085, 7
    %v3087 = vsub.s32 0, %v3086
    %v3088 = vrot.slane %v2815, %v3087
    %v3089 = vlaneseq
    %v3090 = vshrl.u32 %v3089, 7
    %v3091 = vsub.s32 0, %v3090
    %v3092 = vrot.slane %v2816, %v3091
    %v3093 = vlaneseq
    %v3094 = vshrl.u32 %v3093, 7
    %v3095 = vsub.s32 0, %v3094
    %v3096 = vrot.slane %v2817, %v3095
    %v3097 = vlaneseq
    %v3098 = vshrl.u32 %v3097, 7
    %v3099 = vsub.s32 0, %v3098
    %v3100 = vrot.slane %v2818, %v3099
    %v3101 = vlaneseq
    %v3102 = vshrl.u32 %v3101, 7
    %v3103 = vsub.s32 0, %v3102
    %v3104 = vrot.slane %v2819, %v3103
    %v3105 = vlaneseq
    %v3106 = vshrl.u32 %v3105, 7
    %v3107 = vsub.s32 0, %v3106
    %v3108 = vrot.slane %v2820, %v3107
    %v3109 = vlaneseq
    %v3110 = vshrl.u32 %v3109, 7
    %v3111 = vsub.s32 0, %v3110
    %v3112 = vrot.slane %v2821, %v3111
    %v3113 = vlaneseq
    %v3114 = vshrl.u32 %v3113, 7
    %v3115 = vsub.s32 0, %v3114
    %v3116 = vrot.slane %v2822, %v3115
    %v3117 = vlaneseq
    %v3118 = vshrl.u32 %v3117, 7
    %v3119 = vsub.s32 0, %v3118
    %v3120 = vrot.slane %v2823, %v3119
    %v3121 = vlaneseq
    %v3122 = vshrl.u32 %v3121, 7
    %v3123 = vsub.s32 0, %v3122
    %v3124 = vrot.slane %v2824, %v3123
    %v3125 = vlaneseq
    %v3126 = vshrl.u32 %v3125, 7
    %v3127 = vsub.s32 0, %v3126
    %v3128 = vrot.slane %v2825, %v3127
    %v3129 = vlaneseq
    %v3130 = vshrl.u32 %v3129, 7
    %v3131 = vsub.s32 0, %v3130
    %v3132 = vrot.slane %v2826, %v3131
    %v3133 = vlaneseq
    %v3134 = vshrl.u32 %v3133, 7
    %v3135 = vsub.s32 0, %v3134
    %v3136 = vrot.slane %v2827, %v3135
    %v3137 = vlaneseq
    %v3138 = vshrl.u32 %v3137, 7
    %v3139 = vsub.s32 0, %v3138
    %v3140 = vrot.slane %v2828, %v3139
    %v3141 = vlaneseq
    %v3142 = vshrl.u32 %v3141, 7
    %v3143 = vsub.s32 0, %v3142
    %v3144 = vrot.slane %v2829, %v3143
    %v3145 = vlaneseq
    %v3146 = vshrl.u32 %v3145, 7
    %v3147 = vsub.s32 0, %v3146
    %v3148 = vrot.slane %v2830, %v3147
    %v3149 = vlaneseq
    %v3150 = vshrl.u32 %v3149, 7
    %v3151 = vsub.s32 0, %v3150
    %v3152 = vrot.slane %v2831, %v3151
    %v3153 = vlaneseq
    %v3154 = vshrl.u32 %v3153, 7
    %v3155 = vsub.s32 0, %v3154
    %v3156 = vrot.slane %v2832, %v3155
    %v3157 = vlaneseq
    %v3158 = vshrl.u32 %v3157, 7
    %v3159 = vsub.s32 0, %v3158
    %v3160 = vrot.slane %v2833, %v3159
    %v3161 = vlaneseq
    %v3162 = vshrl.u32 %v3161, 7
    %v3163 = vsub.s32 0, %v3162
    %v3164 = vrot.slane %v2834, %v3163
    %v3165 = vlaneseq
    %v3166 = vshrl.u32 %v3165, 7
    %v3167 = vsub.s32 0, %v3166
    %v3168 = vrot.slane %v2835, %v3167
    %v3169 = vlaneseq
    %v3170 = vshrl.u32 %v3169, 7
    %v3171 = vsub.s32 0, %v3170
    %v3172 = vrot.slane %v2836, %v3171
    %v3173 = vlaneseq
    %v3174 = vshrl.u32 %v3173, 7
    %v3175 = vsub.s32 0, %v3174
    %v3176 = vrot.slane %v2837, %v3175
    %v3177 = vlaneseq
    %v3178 = vshrl.u32 %v3177, 7
    %v3179 = vsub.s32 0, %v3178
    %v3180 = vrot.slane %v2838, %v3179
    %v3181 = vlaneseq
    %v3182 = vshrl.u32 %v3181, 7
    %v3183 = vsub.s32 0, %v3182
    %v3184 = vrot.slane %v2839, %v3183
    %v3185 = vlaneseq
    %v3186 = vshrl.u32 %v3185, 7
    %v3187 = vsub.s32 0, %v3186
    %v3188 = vrot.slane %v2840, %v3187
    %v3189 = vlaneseq
    %v3190 = vshrl.u32 %v3189, 7
    %v3191 = vsub.s32 0, %v3190
    %v3192 = vrot.slane %v2841, %v3191
    %v3193 = vlaneseq
    %v3194 = vshrl.u32 %v3193, 7
    %v3195 = vsub.s32 0, %v3194
    %v3196 = vrot.slane %v2842, %v3195
    %v3197 = vlaneseq
    %v3198 = vshrl.u32 %v3197, 7
    %v3199 = vsub.s32 0, %v3198
    %v3200 = vrot.slane %v2843, %v3199
    %v3201 = vlaneseq
    %v3202 = vshrl.u32 %v3201, 7
    %v3203 = vsub.s32 0, %v3202
    %v3204 = vrot.slane %v2844, %v3203
    %vm3205 = vcmask 1041409
    %v3206 = vsel %vm3205, %v2924, %v2920
    %v3207 = vsel %vm2179, %v2928, %v3206
    %vm3208 = vcmask 1043459
    %v3209 = vsel %vm3208, %v2932, %v3207
    %v3210 = vsel %vm2181, %v2936, %v3209
    %vm3211 = vcmask 1045509
    %v3212 = vsel %vm3211, %v2940, %v3210
    %v3213 = vsel %vm3205, %v2948, %v2944
    %v3214 = vsel %vm2179, %v2952, %v3213
    %v3215 = vsel %vm3208, %v2956, %v3214
    %v3216 = vsel %vm2181, %v2960, %v3215
    %v3217 = vsel %vm3211, %v2964, %v3216
    %v3218 = vsel %vm3205, %v2972, %v2968
    %v3219 = vsel %vm2179, %v2976, %v3218
    %v3220 = vsel %vm3208, %v2980, %v3219
    %v3221 = vsel %vm2181, %v2984, %v3220
    %v3222 = vsel %vm3211, %v2988, %v3221
    %v3223 = vsel %vm3205, %v2996, %v2992
    %v3224 = vsel %vm2179, %v3000, %v3223
    %v3225 = vsel %vm3208, %v3004, %v3224
    %v3226 = vsel %vm2181, %v3008, %v3225
    %v3227 = vsel %vm3211, %v3012, %v3226
    %v3228 = vsel %vm3205, %v3020, %v3016
    %v3229 = vsel %vm2179, %v3024, %v3228
    %v3230 = vsel %vm3208, %v3028, %v3229
    %v3231 = vsel %vm2181, %v3032, %v3230
    %v3232 = vsel %vm3211, %v3036, %v3231
    %v3233 = vsel %vm3205, %v3044, %v3040
    %v3234 = vsel %vm2179, %v3048, %v3233
    %v3235 = vsel %vm3208, %v3052, %v3234
    %v3236 = vsel %vm2181, %v3056, %v3235
    %v3237 = vsel %vm3211, %v3060, %v3236
    %v3238 = vsel %vm3205, %v3068, %v3064
    %v3239 = vsel %vm2179, %v3072, %v3238
    %v3240 = vsel %vm3208, %v3076, %v3239
    %v3241 = vsel %vm2181, %v3080, %v3240
    %v3242 = vsel %vm3211, %v3084, %v3241
    %v3243 = vsel %vm3205, %v3092, %v3088
    %v3244 = vsel %vm2179, %v3096, %v3243
    %v3245 = vsel %vm3208, %v3100, %v3244
    %v3246 = vsel %vm2181, %v3104, %v3245
    %v3247 = vsel %vm3211, %v3108, %v3246
    %v3248 = vsel %vm3205, %v3116, %v3112
    %v3249 = vsel %vm2179, %v3120, %v3248
    %v3250 = vsel %vm3208, %v3124, %v3249
    %v3251 = vsel %vm2181, %v3128, %v3250
    %v3252 = vsel %vm3211, %v3132, %v3251
    %v3253 = vsel %vm3205, %v3140, %v3136
    %v3254 = vsel %vm2179, %v3144, %v3253
    %v3255 = vsel %vm3208, %v3148, %v3254
    %v3256 = vsel %vm2181, %v3152, %v3255
    %v3257 = vsel %vm3211, %v3156, %v3256
    %v3258 = vsel %vm3205, %v3164, %v3160
    %v3259 = vsel %vm2179, %v3168, %v3258
    %v3260 = vsel %vm3208, %v3172, %v3259
    %v3261 = vsel %vm2181, %v3176, %v3260
    %v3262 = vsel %vm3211, %v3180, %v3261
    %v3263 = vsel %vm3205, %v3188, %v3184
    %v3264 = vsel %vm2179, %v3192, %v3263
    %v3265 = vsel %vm3208, %v3196, %v3264
    %v3266 = vsel %vm2181, %v3200, %v3265
    %v3267 = vsel %vm3211, %v3204, %v3266
    %3280 = vst [vmem:[%s4] sm:$0x3f] %v3212
    %3281 = vst [vmem:[%s4 + $0x8] sm:$0x3f] %v3217
    %3282 = vst [vmem:[%s4 + $0x10] sm:$0x3f] %v3222
    %3283 = vst [vmem:[%s4 + $0x18] sm:$0x3f] %v3227
    %3284 = vst [vmem:[%s4 + $0x20] sm:$0x3f] %v3232
    %3285 = vst [vmem:[%s4 + $0x28] sm:$0x3f] %v3237
    %3286 = vst [vmem:[%s4 + $0x30] sm:$0x3f] %v3242
    %3287 = vst [vmem:[%s4 + $0x38] sm:$0x3f] %v3247
    %3288 = vst [vmem:[%s4 + $0x40] sm:$0x3f] %v3252
    %3289 = vst [vmem:[%s4 + $0x48] sm:$0x3f] %v3257
    %3290 = vst [vmem:[%s4 + $0x50] sm:$0x3f] %v3262
    %3291 = vst [vmem:[%s4 + $0x58] sm:$0x3f] %v3267
    // Predicated region
    $region26: #{tpu_custom_call.1} parent=1 // pred_check
      _
    $region27: #{tpu_custom_call.1} parent=1 // pred_check_branch
      %3293 = sbr.rel (0) target = $region29
    $region28: #{tpu_custom_call.1} parent=1 // pred_region
      _
    $region29: #{tpu_custom_call.1} parent=1 // pred_fallthru
      _
    // Predicated region
    $region30: #{tpu_custom_call.1} parent=1 // pred_check
      _
    $region31: #{tpu_custom_call.1} parent=1 // pred_check_branch
      %3295 = sbr.rel (0) target = $region33
    $region32: #{tpu_custom_call.1} parent=1 // pred_region
      _
    $region33: #{tpu_custom_call.1} parent=1 // pred_fallthru
      _
    %3296 = vsyncpa [#allocation3], 1
    %3297 = vsyncpa [#allocation5], 1

</llo_original>
